<compile_context>
chip_gen: v6e
topology: v6e:2x2x1
jax: 0.10.0
libtpu: 0.0.40
codegen_flags: <defaults>
</compile_context>

<pallas_src>
import jax
import jax.numpy as jnp
from jax import lax
from jax.experimental import pallas as pl
from jax.experimental.pallas import tpu as pltpu


def _residual_kernel(xm_ref, xt_ref, xb_ref, w3_ref, w1_ref, o_ref, xpw_ref):
    # xm_ref : (1, th, W, Cin)      f32   row tile of x (also residual add)
    # xt_ref : (1, 1,  W, Cin)      f32   row just above the tile (clamped)
    # xb_ref : (1, 1,  W, Cin)      f32   row just below the tile (clamped)
    # w3_ref : (3*Cin, 3*Cr)        bf16  packed 3x3 weights: row = (dw, cin),
    #                                     col = (dh, cr)  (H-taps in N)
    # w1_ref : (Cr, Cout)           bf16  1x1 conv weights
    # o_ref  : (1, th, W, Cout)     f32
    # xpw_ref: (th+2, W+2, Cin)     bf16  scratch: ReLU(x), W-padded, H-halo rows
    th = xm_ref.shape[1]
    W = xm_ref.shape[2]
    Cin = xm_ref.shape[3]
    Cout = o_ref.shape[3]
    Cr3 = w3_ref.shape[1]
    Cr = Cr3 // 3

    t = pl.program_id(1)
    nt = pl.num_programs(1)

    x_c = xm_ref[0]                                           # (th, W, Cin) f32

    # --- assemble ReLU(x) with pad=1 into the staging buffer ----------------
    # Every element of the scratch is rewritten every step (no persistence
    # assumptions -> safe under megacore grid sharding).
    xpw_ref[1:th + 1, 1:W + 1, :] = (
        jnp.maximum(x_c, 0.0).astype(xpw_ref.dtype))
    # zero-pad columns (pad=1 along W): two thin column writes, cheap.
    xpw_ref[:, 0:1, :] = jnp.zeros((th + 2, 1, Cin), xpw_ref.dtype)
    xpw_ref[:, W + 1:W + 2, :] = jnp.zeros((th + 2, 1, Cin), xpw_ref.dtype)

    @pl.when(t > 0)
    def _():  # top halo row from the previous row tile
        xpw_ref[0:1, 1:W + 1, :] = (
            jnp.maximum(xt_ref[0], 0.0).astype(xpw_ref.dtype))

    @pl.when(t == 0)
    def _():  # image top: pad=1 zeros
        xpw_ref[0:1, 1:W + 1, :] = jnp.zeros((1, W, Cin), xpw_ref.dtype)

    @pl.when(t < nt - 1)
    def _():  # bottom halo row from the next row tile
        xpw_ref[th + 1:th + 2, 1:W + 1, :] = (
            jnp.maximum(xb_ref[0], 0.0).astype(xpw_ref.dtype))

    @pl.when(t == nt - 1)
    def _():  # image bottom: pad=1 zeros
        xpw_ref[th + 1:th + 2, 1:W + 1, :] = jnp.zeros((1, W, Cin),
                                                       xpw_ref.dtype)

    xp = xpw_ref[...]                                         # (th+2, W+2, Cin)

    # --- conv3x3 as one matmul: W-only im2col, H-taps folded into N ---------
    # col[(h', w), dw*Cin + cin] = ReLU(x)_padded[h', w + dw, cin]
    col = jnp.concatenate(
        [xp[:, 0:W, :], xp[:, 1:W + 1, :], xp[:, 2:W + 2, :]],
        axis=-1).reshape((th + 2) * W, 3 * Cin)               # bf16
    partial = jnp.dot(col, w3_ref[...],
                      preferred_element_type=jnp.float32)     # (M, 3*Cr) f32
    p = partial.reshape(th + 2, W, Cr3)

    # Fold the three H-taps: output row h uses padded rows h, h+1, h+2.
    conv = (p[0:th, :, 0:Cr]
            + p[1:th + 1, :, Cr:2 * Cr]
            + p[2:th + 2, :, 2 * Cr:3 * Cr])                  # (th, W, Cr) f32

    # --- second ReLU + 1x1 conv (single matmul), residual add in f32 --------
    h = jnp.maximum(conv, 0.0).astype(w1_ref.dtype).reshape(th * W, Cr)
    out = jnp.dot(h, w1_ref[...],
                  preferred_element_type=jnp.float32)         # (th*W, Cout)

    o_ref[0] = out.reshape(th, W, Cout) + x_c


def _pick_tile_h(N, H, W, Cin, Cr, Cout, budget_bytes=20 * 1024 * 1024):
    """Largest divisor of H whose per-step VMEM estimate fits the budget."""
    divisors = [d for d in range(1, H + 1) if H % d == 0]
    best = divisors[0]
    for th in divisors:
        m = (th + 2) * W
        est = (2 * th * W * Cin * 4              # x tile, double-buffered
               + 2 * th * W * Cout * 4           # out tile, double-buffered
               + (th + 2) * (W + 2) * Cin * 2    # padded ReLU scratch (bf16)
               + 2 * m * 3 * Cin * 2             # im2col value + slack (bf16)
               + m * 3 * Cr * 4                  # conv3x3 partials (f32)
               + 2 * (3 * Cin * 3 * Cr + Cr * Cout) * 2)   # weights
        if est <= budget_bytes:
            best = th
    # v7x megacore: keep at least 2 grid steps so both TensorCores get work.
    if N * (H // best) < 2:
        smaller = [d for d in divisors if d < best]
        if smaller:
            best = smaller[-1]
    return best


def residual_forward_nhwc(x_nhwc, w3_oihw, w1_oihw, *, tile_h=None,
                          vmem_limit_bytes=48 * 1024 * 1024):
    """Primary entry point. x_nhwc: (N, H, W, Cin) float32.
    w3_oihw: (Cr, Cin, 3, 3); w1_oihw: (Cout, Cr, 1, 1) (PyTorch weight layout).
    Returns (N, H, W, Cout) float32. No activation-layout transposes."""
    N, H, W, Cin = x_nhwc.shape
    Cr = w3_oihw.shape[0]
    Cout = w1_oihw.shape[0]
    assert Cout == Cin, "residual add requires in_channels == num_hiddens"

    if tile_h is None:
        tile_h = _pick_tile_h(N, H, W, Cin, Cr, Cout)
    assert H % tile_h == 0, "H must be divisible by tile_h"
    n_t = H // tile_h

    x = x_nhwc.astype(jnp.float32)
    # Pack 3x3 weights: (Cr, Cin, dh, dw) -> (dw, cin, dh, cr) -> (3*Cin, 3*Cr)
    w3 = jnp.transpose(w3_oihw, (3, 1, 2, 0)).reshape(3 * Cin, 3 * Cr)
    w3 = w3.astype(jnp.bfloat16)
    w1 = jnp.transpose(w1_oihw[:, :, 0, 0], (1, 0)).astype(jnp.bfloat16)

    out = pl.pallas_call(
        _residual_kernel,
        out_shape=jax.ShapeDtypeStruct((N, H, W, Cout), jnp.float32),
        grid_spec=pltpu.PrefetchScalarGridSpec(
            num_scalar_prefetch=0,
            grid=(N, n_t),
            in_specs=[
                # bulk row tile of x (x is read from HBM once, plus 2 halo rows)
                pl.BlockSpec((1, tile_h, W, Cin), lambda b, t: (b, t, 0, 0)),
                # 1-row top / bottom halos, clamped at the image boundary; the
                # kernel zeroes them at boundary tiles so the clamp is harmless.
                pl.BlockSpec((1, 1, W, Cin),
                             lambda b, t: (b, jnp.maximum(t * tile_h - 1, 0),
                                           0, 0)),
                pl.BlockSpec((1, 1, W, Cin),
                             lambda b, t: (b, jnp.minimum((t + 1) * tile_h,
                                                          H - 1), 0, 0)),
                # weights: constant block index -> resident in VMEM
                pl.BlockSpec((3 * Cin, 3 * Cr), lambda b, t: (0, 0)),
                pl.BlockSpec((Cr, Cout), lambda b, t: (0, 0)),
            ],
            out_specs=pl.BlockSpec((1, tile_h, W, Cout),
                                   lambda b, t: (b, t, 0, 0)),
            scratch_shapes=[
                pltpu.VMEM((tile_h + 2, W + 2, Cin), jnp.bfloat16),
            ],
        ),
        compiler_params=pltpu.CompilerParams(
            dimension_semantics=("parallel", "parallel"),
            vmem_limit_bytes=vmem_limit_bytes),
    )(x, x, x, w3, w1)
    return out


def residual_forward(x_nchw, w3_oihw, w1_oihw, **kw):
    """Drop-in NCHW wrapper matching the PyTorch interface.  NOTE: the two
    transposes cost two extra full HBM passes; prefer residual_forward_nhwc
    and keep the surrounding model NHWC end-to-end."""
    x = jnp.transpose(x_nchw, (0, 2, 3, 1))
    out = residual_forward_nhwc(x, w3_oihw, w1_oihw, **kw)
    return jnp.transpose(out, (0, 3, 1, 2))


def _reference_nhwc(x_nhwc, w3_oihw, w1_oihw):
    """Pure-JAX NHWC reference matching PyTorch semantics, with the same bf16
    matmul operands / f32 accumulation as the kernel."""
    h = jnp.maximum(x_nhwc, 0.0).astype(jnp.bfloat16)
    h = lax.conv_general_dilated(
        h, w3_oihw.astype(jnp.bfloat16), window_strides=(1, 1),
        padding=((1, 1), (1, 1)),
        dimension_numbers=("NHWC", "OIHW", "NHWC"),
        preferred_element_type=jnp.float32)
    h = jnp.maximum(h, 0.0).astype(jnp.bfloat16)
    h = lax.conv_general_dilated(
        h, w1_oihw.astype(jnp.bfloat16), window_strides=(1, 1),
        padding=((0, 0), (0, 0)),
        dimension_numbers=("NHWC", "OIHW", "NHWC"),
        preferred_element_type=jnp.float32)
    return x_nhwc + h


if __name__ == "__main__":
    # Shapes consistent with the module constants: num_hiddens = 128 (so the
    # channel axis is lane-dense) and num_residual_hiddens = 32; small spatial.
    N, H, W = 2, 16, 16
    num_hiddens = 128
    num_residual_hiddens = 32
    C_in = num_hiddens  # residual add requires in_channels == num_hiddens

    key = jax.random.PRNGKey(0)
    kx, k3, k1 = jax.random.split(key, 3)
    x = jax.random.normal(kx, (N, H, W, C_in), dtype=jnp.float32)   # NHWC
    # Deterministic synthetic weights (PyTorch OIHW layout, no checkpoint).
    w3 = jax.random.normal(k3, (num_residual_hiddens, C_in, 3, 3),
                           dtype=jnp.float32) * 0.05
    w1 = jax.random.normal(k1, (num_hiddens, num_residual_hiddens, 1, 1),
                           dtype=jnp.float32) * 0.05

    ref = _reference_nhwc(x, w3, w1)

    # Auto tile (tile_h = H here): grid (2, 1), boundary-pad path.
    out = jax.block_until_ready(residual_forward_nhwc(x, w3, w1))
    assert out.shape == (N, H, W, num_hiddens)
    assert jnp.allclose(out, ref, atol=1e-2, rtol=1e-2), \
        float(jnp.max(jnp.abs(out - ref)))

    # Smaller tile: grid (2, 2), exercises the interior H-halo path too.
    out2 = jax.block_until_ready(residual_forward_nhwc(x, w3, w1, tile_h=8))
    assert jnp.allclose(out2, ref, atol=1e-2, rtol=1e-2), \
        float(jnp.max(jnp.abs(out2 - ref)))

    print("KERNEL_OK")
</pallas_src>

<mosaic_0001>
module attributes {stable_mosaic.version = 11 : i64} {
  func.func @_residual_kernel(%arg0: i32, %arg1: i32, %arg2: memref<1x16x16x128xf32, #tpu.memory_space<vmem>>, %arg3: memref<1x1x16x128xf32, #tpu.memory_space<vmem>>, %arg4: memref<1x1x16x128xf32, #tpu.memory_space<vmem>>, %arg5: memref<384x96xbf16, #tpu.memory_space<vmem>>, %arg6: memref<32x128xbf16, #tpu.memory_space<vmem>>, %arg7: memref<1x16x16x128xf32, #tpu.memory_space<vmem>>, %arg8: memref<18x18x128xbf16, #tpu.memory_space<vmem>>) attributes {dimension_semantics = [#tpu.dimension_semantics<parallel>, #tpu.dimension_semantics<parallel>], iteration_bounds = array<i64: 2, 1>, scalar_prefetch = 0 : i64, scratch_operands = 1 : i64, tpu.core_type = #tpu.core_type<tc>, window_params = [{transform_indices = @transform_0, window_bounds = array<i64: 1, 16, 16, 128>}, {transform_indices = @transform_1, window_bounds = array<i64: 1, 1, 16, 128>}, {transform_indices = @transform_2, window_bounds = array<i64: 1, 1, 16, 128>}, {pipeline_mode = #tpu.pipeline_mode<synchronous>, transform_indices = @transform_3, window_bounds = array<i64: 384, 96>}, {pipeline_mode = #tpu.pipeline_mode<synchronous>, transform_indices = @transform_4, window_bounds = array<i64: 32, 128>}, {transform_indices = @transform_5, window_bounds = array<i64: 1, 16, 16, 128>}]} {
    %c0 = arith.constant 0 : index
    %c0_0 = arith.constant 0 : index
    %c0_1 = arith.constant 0 : index
    %c0_2 = arith.constant 0 : index
    %0 = vector.load %arg2[%c0, %c0_0, %c0_1, %c0_2] : memref<1x16x16x128xf32, #tpu.memory_space<vmem>>, vector<1x16x16x128xf32>
    %1 = vector.shape_cast %0 : vector<1x16x16x128xf32> to vector<16x16x128xf32>
    %cst = arith.constant 0.000000e+00 : f32
    %2 = vector.broadcast %cst : f32 to vector<16x16x128xf32>
    %3 = arith.maximumf %1, %2 : vector<16x16x128xf32>
    %4 = arith.truncf %3 : vector<16x16x128xf32> to vector<16x16x128xbf16>
    %c1 = arith.constant 1 : index
    %c1_3 = arith.constant 1 : index
    %c0_4 = arith.constant 0 : index
    %5 = vector.load %arg8[%c1, %c1_3, %c0_4] : memref<18x18x128xbf16, #tpu.memory_space<vmem>>, vector<16x16x128xbf16>
    tpu.vector_store %arg8[%c1, %c1_3, %c0_4], %4 {strides = array<i32>} : memref<18x18x128xbf16, #tpu.memory_space<vmem>>, vector<16x16x128xbf16>,
    %cst_5 = arith.constant 0.000000e+00 : bf16
    %6 = vector.broadcast %cst_5 : bf16 to vector<18x1x128xbf16>
    %c0_6 = arith.constant 0 : index
    %c0_7 = arith.constant 0 : index
    %c0_8 = arith.constant 0 : index
    %7 = vector.load %arg8[%c0_6, %c0_7, %c0_8] : memref<18x18x128xbf16, #tpu.memory_space<vmem>>, vector<18x1x128xbf16>
    tpu.vector_store %arg8[%c0_6, %c0_7, %c0_8], %6 {strides = array<i32>} : memref<18x18x128xbf16, #tpu.memory_space<vmem>>, vector<18x1x128xbf16>,
    %cst_9 = arith.constant 0.000000e+00 : bf16
    %8 = vector.broadcast %cst_9 : bf16 to vector<18x1x128xbf16>
    %c0_10 = arith.constant 0 : index
    %c17 = arith.constant 17 : index
    %c0_11 = arith.constant 0 : index
    %9 = vector.load %arg8[%c0_10, %c17, %c0_11] : memref<18x18x128xbf16, #tpu.memory_space<vmem>>, vector<18x1x128xbf16>
    tpu.vector_store %arg8[%c0_10, %c17, %c0_11], %8 {strides = array<i32>} : memref<18x18x128xbf16, #tpu.memory_space<vmem>>, vector<18x1x128xbf16>,
    %c0_i32 = arith.constant 0 : i32
    %10 = arith.cmpi sgt, %arg1, %c0_i32 : i32
    %11 = arith.extui %10 : i1 to i32
    %c0_i32_12 = arith.constant 0 : i32
    %12 = arith.cmpi ne, %11, %c0_i32_12 : i32
    scf.if %12 {
      %c0_33 = arith.constant 0 : index
      %c0_34 = arith.constant 0 : index
      %c0_35 = arith.constant 0 : index
      %c0_36 = arith.constant 0 : index
      %47 = vector.load %arg3[%c0_33, %c0_34, %c0_35, %c0_36] : memref<1x1x16x128xf32, #tpu.memory_space<vmem>>, vector<1x1x16x128xf32>
      %48 = vector.shape_cast %47 : vector<1x1x16x128xf32> to vector<1x16x128xf32>
      %cst_37 = arith.constant 0.000000e+00 : f32
      %49 = vector.broadcast %cst_37 : f32 to vector<1x16x128xf32>
      %50 = arith.maximumf %48, %49 : vector<1x16x128xf32>
      %51 = arith.truncf %50 : vector<1x16x128xf32> to vector<1x16x128xbf16>
      %c0_38 = arith.constant 0 : index
      %c1_39 = arith.constant 1 : index
      %c0_40 = arith.constant 0 : index
      %52 = vector.load %arg8[%c0_38, %c1_39, %c0_40] : memref<18x18x128xbf16, #tpu.memory_space<vmem>>, vector<1x16x128xbf16>
      tpu.vector_store %arg8[%c0_38, %c1_39, %c0_40], %51 {strides = array<i32>} : memref<18x18x128xbf16, #tpu.memory_space<vmem>>, vector<1x16x128xbf16>,
    } else {
    }
    %c0_i32_13 = arith.constant 0 : i32
    %13 = arith.cmpi eq, %arg1, %c0_i32_13 : i32
    %14 = arith.extui %13 : i1 to i32
    %c0_i32_14 = arith.constant 0 : i32
    %15 = arith.cmpi ne, %14, %c0_i32_14 : i32
    scf.if %15 {
      %cst_33 = arith.constant 0.000000e+00 : bf16
      %47 = vector.broadcast %cst_33 : bf16 to vector<1x16x128xbf16>
      %c0_34 = arith.constant 0 : index
      %c1_35 = arith.constant 1 : index
      %c0_36 = arith.constant 0 : index
      %48 = vector.load %arg8[%c0_34, %c1_35, %c0_36] : memref<18x18x128xbf16, #tpu.memory_space<vmem>>, vector<1x16x128xbf16>
      tpu.vector_store %arg8[%c0_34, %c1_35, %c0_36], %47 {strides = array<i32>} : memref<18x18x128xbf16, #tpu.memory_space<vmem>>, vector<1x16x128xbf16>,
    } else {
    }
    %c0_i32_15 = arith.constant 0 : i32
    %16 = arith.cmpi slt, %arg1, %c0_i32_15 : i32
    %17 = arith.extui %16 : i1 to i32
    %c0_i32_16 = arith.constant 0 : i32
    %18 = arith.cmpi ne, %17, %c0_i32_16 : i32
    scf.if %18 {
      %c0_33 = arith.constant 0 : index
      %c0_34 = arith.constant 0 : index
      %c0_35 = arith.constant 0 : index
      %c0_36 = arith.constant 0 : index
      %47 = vector.load %arg4[%c0_33, %c0_34, %c0_35, %c0_36] : memref<1x1x16x128xf32, #tpu.memory_space<vmem>>, vector<1x1x16x128xf32>
      %48 = vector.shape_cast %47 : vector<1x1x16x128xf32> to vector<1x16x128xf32>
      %cst_37 = arith.constant 0.000000e+00 : f32
      %49 = vector.broadcast %cst_37 : f32 to vector<1x16x128xf32>
      %50 = arith.maximumf %48, %49 : vector<1x16x128xf32>
      %51 = arith.truncf %50 : vector<1x16x128xf32> to vector<1x16x128xbf16>
      %c17_38 = arith.constant 17 : index
      %c1_39 = arith.constant 1 : index
      %c0_40 = arith.constant 0 : index
      %52 = vector.load %arg8[%c17_38, %c1_39, %c0_40] : memref<18x18x128xbf16, #tpu.memory_space<vmem>>, vector<1x16x128xbf16>
      tpu.vector_store %arg8[%c17_38, %c1_39, %c0_40], %51 {strides = array<i32>} : memref<18x18x128xbf16, #tpu.memory_space<vmem>>, vector<1x16x128xbf16>,
    } else {
    }
    %c0_i32_17 = arith.constant 0 : i32
    %19 = arith.cmpi eq, %arg1, %c0_i32_17 : i32
    %20 = arith.extui %19 : i1 to i32
    %c0_i32_18 = arith.constant 0 : i32
    %21 = arith.cmpi ne, %20, %c0_i32_18 : i32
    scf.if %21 {
      %cst_33 = arith.constant 0.000000e+00 : bf16
      %47 = vector.broadcast %cst_33 : bf16 to vector<1x16x128xbf16>
      %c17_34 = arith.constant 17 : index
      %c1_35 = arith.constant 1 : index
      %c0_36 = arith.constant 0 : index
      %48 = vector.load %arg8[%c17_34, %c1_35, %c0_36] : memref<18x18x128xbf16, #tpu.memory_space<vmem>>, vector<1x16x128xbf16>
      tpu.vector_store %arg8[%c17_34, %c1_35, %c0_36], %47 {strides = array<i32>} : memref<18x18x128xbf16, #tpu.memory_space<vmem>>, vector<1x16x128xbf16>,
    } else {
    }
    %c0_19 = arith.constant 0 : index
    %c0_20 = arith.constant 0 : index
    %c0_21 = arith.constant 0 : index
    %22 = vector.load %arg8[%c0_19, %c0_20, %c0_21] : memref<18x18x128xbf16, #tpu.memory_space<vmem>>, vector<18x18x128xbf16>
    %23 = vector.extract_strided_slice %22 {offsets = [0, 0, 0], sizes = [18, 16, 128], strides = [1, 1, 1]} : vector<18x18x128xbf16> to vector<18x16x128xbf16>
    %24 = vector.extract_strided_slice %22 {offsets = [0, 1, 0], sizes = [18, 16, 128], strides = [1, 1, 1]} : vector<18x18x128xbf16> to vector<18x16x128xbf16>
    %25 = vector.extract_strided_slice %22 {offsets = [0, 2, 0], sizes = [18, 16, 128], strides = [1, 1, 1]} : vector<18x18x128xbf16> to vector<18x16x128xbf16>
    %26 = tpu.concatenate %23, %24, %25 in 2 : vector<18x16x128xbf16>, vector<18x16x128xbf16>, vector<18x16x128xbf16> -> vector<18x16x384xbf16>
    %27 = vector.shape_cast %26 : vector<18x16x384xbf16> to vector<288x384xbf16>
    %c0_22 = arith.constant 0 : index
    %c0_23 = arith.constant 0 : index
    %28 = vector.load %arg5[%c0_22, %c0_23] : memref<384x96xbf16, #tpu.memory_space<vmem>>, vector<384x96xbf16>
    %cst_24 = arith.constant dense<0.000000e+00> : vector<288x96xf32>
    %29 = tpu.matmul %27, %28, %cst_24 {dimension_numbers = #tpu.dot_dimension_numbers<[1], [0], [0], [1], [0, 0, 1, 1], [], []>} : vector<288x384xbf16>, vector<384x96xbf16>, vector<288x96xf32> -> vector<288x96xf32>
    %30 = vector.shape_cast %29 : vector<288x96xf32> to vector<18x16x96xf32>
    %31 = vector.extract_strided_slice %30 {offsets = [0, 0, 0], sizes = [16, 16, 32], strides = [1, 1, 1]} : vector<18x16x96xf32> to vector<16x16x32xf32>
    %32 = vector.extract_strided_slice %30 {offsets = [1, 0, 32], sizes = [16, 16, 32], strides = [1, 1, 1]} : vector<18x16x96xf32> to vector<16x16x32xf32>
    %33 = arith.addf %31, %32 : vector<16x16x32xf32>
    %34 = vector.extract_strided_slice %30 {offsets = [2, 0, 64], sizes = [16, 16, 32], strides = [1, 1, 1]} : vector<18x16x96xf32> to vector<16x16x32xf32>
    %35 = arith.addf %33, %34 : vector<16x16x32xf32>
    %cst_25 = arith.constant 0.000000e+00 : f32
    %36 = vector.broadcast %cst_25 : f32 to vector<16x16x32xf32>
    %37 = arith.maximumf %35, %36 : vector<16x16x32xf32>
    %38 = arith.truncf %37 : vector<16x16x32xf32> to vector<16x16x32xbf16>
    %39 = vector.shape_cast %38 : vector<16x16x32xbf16> to vector<256x32xbf16>
    %c0_26 = arith.constant 0 : index
    %c0_27 = arith.constant 0 : index
    %40 = vector.load %arg6[%c0_26, %c0_27] : memref<32x128xbf16, #tpu.memory_space<vmem>>, vector<32x128xbf16>
    %cst_28 = arith.constant dense<0.000000e+00> : vector<256x128xf32>
    %41 = tpu.matmul %39, %40, %cst_28 {dimension_numbers = #tpu.dot_dimension_numbers<[1], [0], [0], [1], [0, 0, 1, 1], [], []>} : vector<256x32xbf16>, vector<32x128xbf16>, vector<256x128xf32> -> vector<256x128xf32>
    %42 = vector.shape_cast %41 : vector<256x128xf32> to vector<16x16x128xf32>
    %43 = arith.addf %42, %1 : vector<16x16x128xf32>
    %c0_29 = arith.constant 0 : index
    %c0_30 = arith.constant 0 : index
    %c0_31 = arith.constant 0 : index
    %c0_32 = arith.constant 0 : index
    %44 = vector.load %arg7[%c0_29, %c0_30, %c0_31, %c0_32] : memref<1x16x16x128xf32, #tpu.memory_space<vmem>>, vector<1x16x16x128xf32>
    %45 = vector.shape_cast %44 : vector<1x16x16x128xf32> to vector<16x16x128xf32>
    %46 = vector.shape_cast %43 : vector<16x16x128xf32> to vector<1x16x16x128xf32>
    tpu.vector_store %arg7[%c0_29, %c0_30, %c0_31, %c0_32], %46 {strides = array<i32>} : memref<1x16x16x128xf32, #tpu.memory_space<vmem>>, vector<1x16x16x128xf32>,
    return
  }
  func.func @transform_0(%arg0: i32, %arg1: i32) -> (i32, i32, i32, i32) {
    %c0_i32 = arith.constant 0 : i32
    %c0_i32_0 = arith.constant 0 : i32
    %c0_i32_1 = arith.constant 0 : i32
    return %arg0, %arg1, %c0_i32, %c0_i32_0 : i32, i32, i32, i32
  }
  func.func @transform_1(%arg0: i32, %arg1: i32) -> (i32, i32, i32, i32) {
    %c16_i32 = arith.constant 16 : i32
    %0 = arith.muli %arg1, %c16_i32 : i32
    %c1_i32 = arith.constant 1 : i32
    %1 = arith.subi %0, %c1_i32 : i32
    %c0_i32 = arith.constant 0 : i32
    %2 = arith.maxsi %1, %c0_i32 : i32
    %c0_i32_0 = arith.constant 0 : i32
    %c0_i32_1 = arith.constant 0 : i32
    %c0_i32_2 = arith.constant 0 : i32
    return %arg0, %2, %c0_i32_0, %c0_i32_1 : i32, i32, i32, i32
  }
  func.func @transform_2(%arg0: i32, %arg1: i32) -> (i32, i32, i32, i32) {
    %c1_i32 = arith.constant 1 : i32
    %0 = arith.addi %arg1, %c1_i32 : i32
    %c16_i32 = arith.constant 16 : i32
    %1 = arith.muli %0, %c16_i32 : i32
    %c15_i32 = arith.constant 15 : i32
    %2 = arith.minsi %1, %c15_i32 : i32
    %c0_i32 = arith.constant 0 : i32
    %c0_i32_0 = arith.constant 0 : i32
    %c0_i32_1 = arith.constant 0 : i32
    return %arg0, %2, %c0_i32, %c0_i32_0 : i32, i32, i32, i32
  }
  func.func @transform_3(%arg0: i32, %arg1: i32) -> (i32, i32) {
    %c0_i32 = arith.constant 0 : i32
    %c0_i32_0 = arith.constant 0 : i32
    %c0_i32_1 = arith.constant 0 : i32
    return %c0_i32, %c0_i32_0 : i32, i32
  }
  func.func @transform_4(%arg0: i32, %arg1: i32) -> (i32, i32) {
    %c0_i32 = arith.constant 0 : i32
    %c0_i32_0 = arith.constant 0 : i32
    %c0_i32_1 = arith.constant 0 : i32
    return %c0_i32, %c0_i32_0 : i32, i32
  }
  func.func @transform_5(%arg0: i32, %arg1: i32) -> (i32, i32, i32, i32) {
    %c0_i32 = arith.constant 0 : i32
    %c0_i32_0 = arith.constant 0 : i32
    %c0_i32_1 = arith.constant 0 : i32
    return %arg0, %arg1, %c0_i32, %c0_i32_0 : i32, i32, i32, i32
  }
}

</mosaic_0001>

<llo_original>
// kernel: tpu_custom_call.1
$region0: #{tpu_custom_call.1}
  #allocation0 [shape = 'u32[]', space=smem, size = 0x4, offset = 0x4, fixed_abs, tag = 'smem constant byte address 0x4 - core index']
  #allocation1 [shape = 'u32[144,128]{1,0:T(1,128)}', space=vmem, size = 0x12000, scoped, tag = 'internal scratch']
  #allocation2 [shape = 'bf16[18,18,128]{2,1,0:T(8,128)(2,1)}', space=vmem, size = 0x1b000, scoped, tag = 'scratch operand']
  %s0 = inlined_call_operand.hbm [shape: f32[2,16,16,128], index: 0, kind: input, shape index: {}]
  %s1 = inlined_call_operand.hbm [shape: f32[2,16,16,128], index: 1, kind: input, shape index: {}]
  %s2 = inlined_call_operand.hbm [shape: f32[2,16,16,128], index: 2, kind: input, shape index: {}]
  %s3 = inlined_call_operand.vmem [shape: bf16[384,96], index: 3, kind: input, shape index: {}]
  %s4 = inlined_call_operand.vmem [shape: bf16[32,128], index: 4, kind: input, shape index: {}]
  %s5 = inlined_call_operand.hbm [shape: f32[2,16,16,128], index: 5, kind: output, shape index: {}]
  %s6 = sld [smem:[#allocation0]]
  $region81: #{tpu_custom_call.1} parent=0
    _
  %s8 = ssub.s32 1, %s6
  %s9 = scalar_select 0, %s8, %s6
  $region1: #{tpu_custom_call.1} parent=0
    #allocation3 [shape = 'u8[262144]{0}', space=vmem, size = 0x40000, scoped, tag = 'input window, operand 0']
    #allocation4 [shape = 's32[2]{0}', space=sflag, size = 0x8, scoped, tag = 'scoped memory for tpu_custom_call.1']
    #allocation5 [shape = 's32[2]{0}', space=sflag, size = 0x8, scoped, tag = 'scoped memory for tpu_custom_call.1']
    #allocation6 [shape = 'u8[16384]{0}', space=vmem, size = 0x4000, scoped, tag = 'input window, operand 1']
    #allocation7 [shape = 's32[2]{0}', space=sflag, size = 0x8, scoped, tag = 'scoped memory for tpu_custom_call.1']
    #allocation8 [shape = 'u8[16384]{0}', space=vmem, size = 0x4000, scoped, tag = 'input window, operand 2']
    #allocation9 [shape = 'u8[262144]{0}', space=vmem, size = 0x40000, scoped, tag = 'output window, operand 0']
    %10 = vsyncpa [#allocation4], 0
    %s11 = scalar_lea.sflag [#allocation4], 1
    %12 = vsyncpa %s11, 0
    %13 = vsyncpa [#allocation7], 0
    %s14 = scalar_lea.sflag [#allocation7], 1
    %15 = vsyncpa %s14, 0
    %16 = vsyncpa [#allocation5], 0
    %s17 = scalar_lea.sflag [#allocation5], 1
    %18 = vsyncpa %s17, 0
    loop: start=0, step=1, limit=4
    $region2: #{tpu_custom_call.1} parent=1 // loop_pre_header
      _
    $region3: #{tpu_custom_call.1} parent=1 // loop_header
      %s20 = sphi 0, %s24
      %p21 = scmp.ge.s32.totalorder %s20, 4
      %s27 = sphi 0, %s39
      %s28 = sphi 0, %s35
      %s29 = sphi 0, %s27
      %s30 = sphi 0, %s28
      %s31 = sphi 0, %s29
      %s32 = sphi 0, %s30
      %s44 = sphi 0, %s46
      %s47 = sphi 0, %s44
      %s48 = sphi 0, %s47
      %s64 = sphi 0, %s48
      %s80 = sphi 0, %s82
      %s83 = sphi 0, %s80
      %s84 = sphi 0, %s83
      %s100 = sphi 0, %s84
      %s116 = sphi 0, %s118
      %s119 = sphi 0, %s116
      %s120 = sphi 0, %s119
      %s136 = sphi 0, %s120
      %s140 = sphi 0, %s140
      %s142 = sphi 0, %s140
      %s143 = sphi 0, %s142
      %s157 = sphi 0, %s143
      %s161 = sphi 0, %s161
      %s163 = sphi 0, %s161
      %s164 = sphi 0, %s163
      %s178 = sphi 0, %s164
      %s186 = sphi 0, %s188
      %s189 = sphi 0, %s186
      %s190 = sphi 0, %s189
      %s206 = sphi 0, %s190
    $region4: #{tpu_custom_call.1} parent=1 // loop_header_branch
      %23 = sbr.rel (%p21) target = $region8
    $region5: #{tpu_custom_call.1} parent=1 // loop_body
      %s25 = ssub.s32 %s20, 1
      %s26 = ssub.s32 %s20, 2
      %s33 = sadd.s32 1, %s28
      %p34 = scmp.ge.s32.totalorder %s33, 1
      %s35 = scalar_select %p34, 0, %s33
      %s36 = sadd.s32 1, %s27
      %s37 = scalar_select %p34, %s36, %s27
      %p38 = scmp.ge.s32.totalorder %s37, 2
      %s39 = scalar_select %p38, 0, %s37
      %s40 = ssub.s32 %s27, %s39
      %s41 = ssub.s32 %s28, %s35
      %s42 = sor.u32 %s40, %s41
      %p43 = scmp.eq.s32.totalorder %s42, 0
      %s45 = sadd.s32 %s44, 1
      %s46 = scalar_select %p43, %s44, %s45
      %p49 = pneg %p43
      %p50 = scmp.eq.s32.totalorder %s20, 1
      %p51 = por %p49, %p50
      %p52 = scmp.ne.s32.totalorder %s44, %s47
      %p53 = scmp.eq.s32.totalorder %s20, 0
      %p54 = por %p52, %p53
      %p55 = scmp.ne.s32.totalorder %s44, %s47
      %p56 = scmp.eq.s32.totalorder %s25, 1
      %p57 = por %p55, %p56
      %p58 = scmp.ne.s32.totalorder %s47, %s48
      %p59 = scmp.eq.s32.totalorder %s25, 0
      %p60 = por %p58, %p59
      %p61 = scmp.ne.s32.totalorder %s47, %s48
      %p62 = scmp.eq.s32.totalorder %s26, 1
      %p63 = por %p61, %p62
      %p65 = scmp.ne.s32.totalorder %s48, %s64
      %p66 = scmp.eq.s32.totalorder %s26, 0
      %p67 = por %p65, %p66
      %s68 = smul.u32 %s28, 16
      %s69 = ssub.s32 %s68, 1
      %p70 = scmp.gt.s32.totalorder %s69, 0
      %s71 = scalar_select %p70, %s69, 0
      %s72 = smul.u32 %s35, 16
      %s73 = ssub.s32 %s72, 1
      %p74 = scmp.gt.s32.totalorder %s73, 0
      %s75 = scalar_select %p74, %s73, 0
      %s76 = ssub.s32 %s27, %s39
      %s77 = ssub.s32 %s71, %s75
      %s78 = sor.u32 %s76, %s77
      %p79 = scmp.eq.s32.totalorder %s78, 0
      %s81 = sadd.s32 %s80, 1
      %s82 = scalar_select %p79, %s80, %s81
      %p85 = pneg %p79
      %p86 = scmp.eq.s32.totalorder %s20, 1
      %p87 = por %p85, %p86
      %p88 = scmp.ne.s32.totalorder %s80, %s83
      %p89 = scmp.eq.s32.totalorder %s20, 0
      %p90 = por %p88, %p89
      %p91 = scmp.ne.s32.totalorder %s80, %s83
      %p92 = scmp.eq.s32.totalorder %s25, 1
      %p93 = por %p91, %p92
      %p94 = scmp.ne.s32.totalorder %s83, %s84
      %p95 = scmp.eq.s32.totalorder %s25, 0
      %p96 = por %p94, %p95
      %p97 = scmp.ne.s32.totalorder %s83, %s84
      %p98 = scmp.eq.s32.totalorder %s26, 1
      %p99 = por %p97, %p98
      %p101 = scmp.ne.s32.totalorder %s84, %s100
      %p102 = scmp.eq.s32.totalorder %s26, 0
      %p103 = por %p101, %p102
      %s104 = sadd.s32 %s28, 1
      %s105 = smul.u32 %s104, 16
      %p106 = scmp.lt.s32.totalorder %s105, 15
      %s107 = scalar_select %p106, %s105, 15
      %s108 = sadd.s32 %s35, 1
      %s109 = smul.u32 %s108, 16
      %p110 = scmp.lt.s32.totalorder %s109, 15
      %s111 = scalar_select %p110, %s109, 15
      %s112 = ssub.s32 %s27, %s39
      %s113 = ssub.s32 %s107, %s111
      %s114 = sor.u32 %s112, %s113
      %p115 = scmp.eq.s32.totalorder %s114, 0
      %s117 = sadd.s32 %s116, 1
      %s118 = scalar_select %p115, %s116, %s117
      %p121 = pneg %p115
      %p122 = scmp.eq.s32.totalorder %s20, 1
      %p123 = por %p121, %p122
      %p124 = scmp.ne.s32.totalorder %s116, %s119
      %p125 = scmp.eq.s32.totalorder %s20, 0
      %p126 = por %p124, %p125
      %p127 = scmp.ne.s32.totalorder %s116, %s119
      %p128 = scmp.eq.s32.totalorder %s25, 1
      %p129 = por %p127, %p128
      %p130 = scmp.ne.s32.totalorder %s119, %s120
      %p131 = scmp.eq.s32.totalorder %s25, 0
      %p132 = por %p130, %p131
      %p133 = scmp.ne.s32.totalorder %s119, %s120
      %p134 = scmp.eq.s32.totalorder %s26, 1
      %p135 = por %p133, %p134
      %p137 = scmp.ne.s32.totalorder %s120, %s136
      %p138 = scmp.eq.s32.totalorder %s26, 0
      %p139 = por %p137, %p138
      %s141 = sadd.s32 %s140, 1
      %p144 = scmp.eq.s32.totalorder %s20, 1
      %p145 = scmp.ne.s32.totalorder %s140, %s142
      %p146 = scmp.eq.s32.totalorder %s20, 0
      %p147 = por %p145, %p146
      %p148 = scmp.ne.s32.totalorder %s140, %s142
      %p149 = scmp.eq.s32.totalorder %s25, 1
      %p150 = por %p148, %p149
      %p151 = scmp.ne.s32.totalorder %s142, %s143
      %p152 = scmp.eq.s32.totalorder %s25, 0
      %p153 = por %p151, %p152
      %p154 = scmp.ne.s32.totalorder %s142, %s143
      %p155 = scmp.eq.s32.totalorder %s26, 1
      %p156 = por %p154, %p155
      %p158 = scmp.ne.s32.totalorder %s143, %s157
      %p159 = scmp.eq.s32.totalorder %s26, 0
      %p160 = por %p158, %p159
      %s162 = sadd.s32 %s161, 1
      %p165 = scmp.eq.s32.totalorder %s20, 1
      %p166 = scmp.ne.s32.totalorder %s161, %s163
      %p167 = scmp.eq.s32.totalorder %s20, 0
      %p168 = por %p166, %p167
      %p169 = scmp.ne.s32.totalorder %s161, %s163
      %p170 = scmp.eq.s32.totalorder %s25, 1
      %p171 = por %p169, %p170
      %p172 = scmp.ne.s32.totalorder %s163, %s164
      %p173 = scmp.eq.s32.totalorder %s25, 0
      %p174 = por %p172, %p173
      %p175 = scmp.ne.s32.totalorder %s163, %s164
      %p176 = scmp.eq.s32.totalorder %s26, 1
      %p177 = por %p175, %p176
      %p179 = scmp.ne.s32.totalorder %s164, %s178
      %p180 = scmp.eq.s32.totalorder %s26, 0
      %p181 = por %p179, %p180
      %s182 = ssub.s32 %s27, %s39
      %s183 = ssub.s32 %s28, %s35
      %s184 = sor.u32 %s182, %s183
      %p185 = scmp.eq.s32.totalorder %s184, 0
      %s187 = sadd.s32 %s186, 1
      %s188 = scalar_select %p185, %s186, %s187
      %p191 = pneg %p185
      %p192 = scmp.eq.s32.totalorder %s20, 1
      %p193 = por %p191, %p192
      %p194 = scmp.ne.s32.totalorder %s186, %s189
      %p195 = scmp.eq.s32.totalorder %s20, 0
      %p196 = por %p194, %p195
      %p197 = scmp.ne.s32.totalorder %s186, %s189
      %p198 = scmp.eq.s32.totalorder %s25, 1
      %p199 = por %p197, %p198
      %p200 = scmp.ne.s32.totalorder %s189, %s190
      %p201 = scmp.eq.s32.totalorder %s25, 0
      %p202 = por %p200, %p201
      %p203 = scmp.ne.s32.totalorder %s189, %s190
      %p204 = scmp.eq.s32.totalorder %s26, 1
      %p205 = por %p203, %p204
      %p207 = scmp.ne.s32.totalorder %s190, %s206
      %p208 = scmp.eq.s32.totalorder %s26, 0
      %p209 = por %p207, %p208
      %p210 = scmp.le.s32.totalorder 1, %s20
      %p211 = scmp.lt.s32.totalorder %s20, 3
      %p212 = pnand %p210, %p211
      %p213 = pneg %p212
      // Predicated region
      $region9: #{tpu_custom_call.1} parent=5 // pred_check
        _
      $region10: #{tpu_custom_call.1} parent=5 // pred_check_branch
        %215 = sbr.rel (%p212) target = $region12
      $region11: #{tpu_custom_call.1} parent=5 // pred_region
        %s216 = ssub.s32 %s20, 1
        // Predicated region
        $region13: #{tpu_custom_call.1} parent=11 // pred_check
          %p217 = pneg %p153
        $region14: #{tpu_custom_call.1} parent=11 // pred_check_branch
          %219 = sbr.rel (%p217) target = $region16
        $region15: #{tpu_custom_call.1} parent=11 // pred_region
          _
        $region16: #{tpu_custom_call.1} parent=11 // pred_fallthru
          _
        // Predicated region
        $region17: #{tpu_custom_call.1} parent=11 // pred_check
          %p220 = pneg %p174
        $region18: #{tpu_custom_call.1} parent=11 // pred_check_branch
          %222 = sbr.rel (%p220) target = $region20
        $region19: #{tpu_custom_call.1} parent=11 // pred_region
          _
        $region20: #{tpu_custom_call.1} parent=11 // pred_fallthru
          _
      $region12: #{tpu_custom_call.1} parent=5 // pred_fallthru
        _
      %p223 = scmp.lt.s32.totalorder %s20, 2
      // Predicated region
      $region21: #{tpu_custom_call.1} parent=5 // pred_check
        %p224 = pneg %p223
      $region22: #{tpu_custom_call.1} parent=5 // pred_check_branch
        %226 = sbr.rel (%p224) target = $region24
      $region23: #{tpu_custom_call.1} parent=5 // pred_region
        // Predicated region
        $region25: #{tpu_custom_call.1} parent=23 // pred_check
          %p227 = pneg %p54
        $region26: #{tpu_custom_call.1} parent=23 // pred_check_branch
          %229 = sbr.rel (%p227) target = $region28
        $region27: #{tpu_custom_call.1} parent=23 // pred_region
          %s230 = sand.u32 %s44, 1
          %s231 = scalar_lea.sflag [#allocation4], %s230
          %s232 = sand.u32 %s44, 1
          %s233 = smul.addr %s232, 256
          %s234 = scalar_lea.vmem [#allocation3], %s233
          %s235 = smul.u32 16, %s28
          %s237 = ssub.s32 4096, 4096
          %238 = vsyncadd %s231, %s237
          %s239 = smul.addr %s235, 2
          %s240 = smul.addr %s27, 32
          %s241 = sadd.s32 %s239, %s240
          %s242 = smul.addr %s241, 128
          %s243 = scalar_lea.hbm %s0, %s242
          %s244 = sshll.u32 %s234, 4
          %s245 = int_to_ptr.vmem [resolvable:$true] %s244
          %250 = dma.hbm_to_vmem [thread:$0]  %s243, 4096, %s245, %s231, 128, 128, 8
        $region28: #{tpu_custom_call.1} parent=23 // pred_fallthru
          _
        // Predicated region
        $region29: #{tpu_custom_call.1} parent=23 // pred_check
          %p251 = pneg %p90
        $region30: #{tpu_custom_call.1} parent=23 // pred_check_branch
          %253 = sbr.rel (%p251) target = $region32
        $region31: #{tpu_custom_call.1} parent=23 // pred_region
          %s254 = sand.u32 %s20, 1
          %s255 = scalar_lea.sflag [#allocation7], %s254
          %s256 = sand.u32 %s80, 1
          %s257 = smul.addr %s256, 16
          %s258 = scalar_lea.vmem [#allocation6], %s257
          %s259 = smul.u32 %s28, 16
          %s260 = ssub.s32 %s259, 1
          %p261 = scmp.gt.s32.totalorder %s260, 0
          %s262 = scalar_select %p261, %s260, 0
          %s264 = ssub.s32 256, 256
          %265 = vsyncadd %s255, %s264
          %s266 = smul.addr %s262, 2
          %s267 = smul.addr %s27, 32
          %s268 = sadd.s32 %s266, %s267
          %s269 = smul.addr %s268, 128
          %s270 = scalar_lea.hbm %s1, %s269
          %s271 = sshll.u32 %s258, 4
          %s272 = int_to_ptr.vmem [resolvable:$true] %s271
          %277 = dma.hbm_to_vmem [thread:$0]  %s270, 256, %s272, %s255, 128, 128, 8
        $region32: #{tpu_custom_call.1} parent=23 // pred_fallthru
          _
        // Predicated region
        $region33: #{tpu_custom_call.1} parent=23 // pred_check
          %p278 = pneg %p126
        $region34: #{tpu_custom_call.1} parent=23 // pred_check_branch
          %280 = sbr.rel (%p278) target = $region36
        $region35: #{tpu_custom_call.1} parent=23 // pred_region
          %s281 = sand.u32 %s20, 1
          %s282 = scalar_lea.sflag [#allocation7], %s281
          %s283 = sand.u32 %s116, 1
          %s284 = smul.addr %s283, 16
          %s285 = scalar_lea.vmem [#allocation8], %s284
          %s286 = sadd.s32 %s28, 1
          %s287 = smul.u32 %s286, 16
          %p288 = scmp.lt.s32.totalorder %s287, 15
          %s289 = scalar_select %p288, %s287, 15
          %s291 = ssub.s32 256, 256
          %292 = vsyncadd %s282, %s291
          %s293 = smul.addr %s289, 2
          %s294 = smul.addr %s27, 32
          %s295 = sadd.s32 %s293, %s294
          %s296 = smul.addr %s295, 128
          %s297 = scalar_lea.hbm %s2, %s296
          %s298 = sshll.u32 %s285, 4
          %s299 = int_to_ptr.vmem [resolvable:$true] %s298
          %304 = dma.hbm_to_vmem [thread:$0]  %s297, 256, %s299, %s282, 128, 128, 8
        $region36: #{tpu_custom_call.1} parent=23 // pred_fallthru
          _
      $region24: #{tpu_custom_call.1} parent=5 // pred_fallthru
        _
      %p305 = scmp.le.s32.totalorder 1, %s20
      %p306 = scmp.lt.s32.totalorder %s20, 3
      %p307 = pnand %p305, %p306
      %p308 = pneg %p307
      // Predicated region
      $region37: #{tpu_custom_call.1} parent=5 // pred_check
        _
      $region38: #{tpu_custom_call.1} parent=5 // pred_check_branch
        %310 = sbr.rel (%p307) target = $region40
      $region39: #{tpu_custom_call.1} parent=5 // pred_region
        %s311 = ssub.s32 %s20, 1
        %s312 = sand.u32 %s47, 1
        %s313 = scalar_lea.sflag [#allocation4], %s312
        %s314 = sand.u32 %s47, 1
        %s315 = smul.addr %s314, 256
        %s316 = scalar_lea.vmem [#allocation3], %s315
        // Predicated region
        $region41: #{tpu_custom_call.1} parent=39 // pred_check
          %p317 = pneg %p60
        $region42: #{tpu_custom_call.1} parent=39 // pred_check_branch
          %319 = sbr.rel (%p317) target = $region44
        $region43: #{tpu_custom_call.1} parent=39 // pred_region
          %320 = dma.done %s313, 4096
        $region44: #{tpu_custom_call.1} parent=39 // pred_fallthru
          _
        %s321 = sand.u32 %s25, 1
        %s322 = scalar_lea.sflag [#allocation7], %s321
        %s323 = sand.u32 %s83, 1
        %s324 = smul.addr %s323, 16
        %s325 = scalar_lea.vmem [#allocation6], %s324
        // Predicated region
        $region45: #{tpu_custom_call.1} parent=39 // pred_check
          %p326 = pneg %p96
        $region46: #{tpu_custom_call.1} parent=39 // pred_check_branch
          %328 = sbr.rel (%p326) target = $region48
        $region47: #{tpu_custom_call.1} parent=39 // pred_region
          %329 = dma.done %s322, 256
        $region48: #{tpu_custom_call.1} parent=39 // pred_fallthru
          _
        %s330 = sand.u32 %s25, 1
        %s331 = scalar_lea.sflag [#allocation7], %s330
        %s332 = sand.u32 %s119, 1
        %s333 = smul.addr %s332, 16
        %s334 = scalar_lea.vmem [#allocation8], %s333
        // Predicated region
        $region49: #{tpu_custom_call.1} parent=39 // pred_check
          %p335 = pneg %p132
        $region50: #{tpu_custom_call.1} parent=39 // pred_check_branch
          %337 = sbr.rel (%p335) target = $region52
        $region51: #{tpu_custom_call.1} parent=39 // pred_region
          %338 = dma.done %s331, 256
        $region52: #{tpu_custom_call.1} parent=39 // pred_fallthru
          _
        %s339 = sand.u32 %s47, 1
        %s340 = scalar_lea.sflag [#allocation4], %s339
        %s341 = sand.u32 %s47, 1
        %s342 = smul.addr %s341, 256
        %s343 = scalar_lea.vmem [#allocation3], %s342
        %p344 = pneg %p60
        %p345 = pneg %p57
        %s346 = sand.u32 %s25, 1
        %s347 = scalar_lea.sflag [#allocation7], %s346
        %s348 = sand.u32 %s83, 1
        %s349 = smul.addr %s348, 16
        %s350 = scalar_lea.vmem [#allocation6], %s349
        %p351 = pneg %p96
        %p352 = pneg %p93
        %s353 = sand.u32 %s25, 1
        %s354 = scalar_lea.sflag [#allocation7], %s353
        %s355 = sand.u32 %s119, 1
        %s356 = smul.addr %s355, 16
        %s357 = scalar_lea.vmem [#allocation8], %s356
        %p358 = pneg %p132
        %p359 = pneg %p129
        %p360 = pneg %p153
        %p361 = pneg %p150
        %p362 = pneg %p174
        %p363 = pneg %p171
        %p364 = pneg %p202
        %p365 = pneg %p199
        %s366 = sand.u32 %s189, 1
        %s367 = scalar_lea.sflag [#allocation5], %s366
        %s368 = sand.u32 %s189, 1
        %s369 = smul.addr %s368, 256
        %s370 = scalar_lea.vmem [#allocation9], %s369
        %s371 = smul.u32 16, %s30
        %s372 = smul.u32 %s30, 16
        %s373 = ssub.s32 %s372, 1
        %p374 = scmp.gt.s32.totalorder %s373, 0
        %s375 = scalar_select %p374, %s373, 0
        %s376 = sadd.s32 %s30, 1
        %s377 = smul.u32 %s376, 16
        %p378 = scmp.lt.s32.totalorder %s377, 15
        %s379 = scalar_select %p378, %s377, 15
        %s380 = smul.u32 16, %s30
        %v382 = vld [vmem:[%s316] sm:$0xff]
        %v383 = vld [vmem:[%s316 + $0x8] sm:$0xff]
        %v384 = vld [vmem:[%s316 + $0x10] sm:$0xff]
        %v385 = vld [vmem:[%s316 + $0x18] sm:$0xff]
        %v386 = vld [vmem:[%s316 + $0x20] sm:$0xff]
        %v387 = vld [vmem:[%s316 + $0x28] sm:$0xff]
        %v388 = vld [vmem:[%s316 + $0x30] sm:$0xff]
        %v389 = vld [vmem:[%s316 + $0x38] sm:$0xff]
        %v390 = vld [vmem:[%s316 + $0x40] sm:$0xff]
        %v391 = vld [vmem:[%s316 + $0x48] sm:$0xff]
        %v392 = vld [vmem:[%s316 + $0x50] sm:$0xff]
        %v393 = vld [vmem:[%s316 + $0x58] sm:$0xff]
        %v394 = vld [vmem:[%s316 + $0x60] sm:$0xff]
        %v395 = vld [vmem:[%s316 + $0x68] sm:$0xff]
        %v396 = vld [vmem:[%s316 + $0x70] sm:$0xff]
        %v397 = vld [vmem:[%s316 + $0x78] sm:$0xff]
        %v398 = vld [vmem:[%s316 + $0x80] sm:$0xff]
        %v399 = vld [vmem:[%s316 + $0x88] sm:$0xff]
        %v400 = vld [vmem:[%s316 + $0x90] sm:$0xff]
        %v401 = vld [vmem:[%s316 + $0x98] sm:$0xff]
        %v402 = vld [vmem:[%s316 + $0xa0] sm:$0xff]
        %v403 = vld [vmem:[%s316 + $0xa8] sm:$0xff]
        %v404 = vld [vmem:[%s316 + $0xb0] sm:$0xff]
        %v405 = vld [vmem:[%s316 + $0xb8] sm:$0xff]
        %v406 = vld [vmem:[%s316 + $0xc0] sm:$0xff]
        %v407 = vld [vmem:[%s316 + $0xc8] sm:$0xff]
        %v408 = vld [vmem:[%s316 + $0xd0] sm:$0xff]
        %v409 = vld [vmem:[%s316 + $0xd8] sm:$0xff]
        %v410 = vld [vmem:[%s316 + $0xe0] sm:$0xff]
        %v411 = vld [vmem:[%s316 + $0xe8] sm:$0xff]
        %v412 = vld [vmem:[%s316 + $0xf0] sm:$0xff]
        %v413 = vld [vmem:[%s316 + $0xf8] sm:$0xff]
        %v414 = vmax.f32 %v382, 0.0
        %v415 = vmax.f32 %v383, 0.0
        %v416 = vmax.f32 %v384, 0.0
        %v417 = vmax.f32 %v385, 0.0
        %v418 = vmax.f32 %v386, 0.0
        %v419 = vmax.f32 %v387, 0.0
        %v420 = vmax.f32 %v388, 0.0
        %v421 = vmax.f32 %v389, 0.0
        %v422 = vmax.f32 %v390, 0.0
        %v423 = vmax.f32 %v391, 0.0
        %v424 = vmax.f32 %v392, 0.0
        %v425 = vmax.f32 %v393, 0.0
        %v426 = vmax.f32 %v394, 0.0
        %v427 = vmax.f32 %v395, 0.0
        %v428 = vmax.f32 %v396, 0.0
        %v429 = vmax.f32 %v397, 0.0
        %v430 = vmax.f32 %v398, 0.0
        %v431 = vmax.f32 %v399, 0.0
        %v432 = vmax.f32 %v400, 0.0
        %v433 = vmax.f32 %v401, 0.0
        %v434 = vmax.f32 %v402, 0.0
        %v435 = vmax.f32 %v403, 0.0
        %v436 = vmax.f32 %v404, 0.0
        %v437 = vmax.f32 %v405, 0.0
        %v438 = vmax.f32 %v406, 0.0
        %v439 = vmax.f32 %v407, 0.0
        %v440 = vmax.f32 %v408, 0.0
        %v441 = vmax.f32 %v409, 0.0
        %v442 = vmax.f32 %v410, 0.0
        %v443 = vmax.f32 %v411, 0.0
        %v444 = vmax.f32 %v412, 0.0
        %v445 = vmax.f32 %v413, 0.0
        %v446 = vpack.c.bf16 %v415, %v414
        %v447 = vpack.c.bf16 %v417, %v416
        %v448 = vpack.c.bf16 %v419, %v418
        %v449 = vpack.c.bf16 %v421, %v420
        %v450 = vpack.c.bf16 %v423, %v422
        %v451 = vpack.c.bf16 %v425, %v424
        %v452 = vpack.c.bf16 %v427, %v426
        %v453 = vpack.c.bf16 %v429, %v428
        %v454 = vpack.c.bf16 %v431, %v430
        %v455 = vpack.c.bf16 %v433, %v432
        %v456 = vpack.c.bf16 %v435, %v434
        %v457 = vpack.c.bf16 %v437, %v436
        %v458 = vpack.c.bf16 %v439, %v438
        %v459 = vpack.c.bf16 %v441, %v440
        %v460 = vpack.c.bf16 %v443, %v442
        %v461 = vpack.c.bf16 %v445, %v444
        %v478 = vunpack.c.l.b16 %v446
        %v479 = vunpack.c.h.b16 %v446
        %v480 = vunpack.c.l.b16 %v447
        %v481 = vunpack.c.h.b16 %v447
        %v482 = vunpack.c.l.b16 %v448
        %v483 = vunpack.c.h.b16 %v448
        %v484 = vunpack.c.l.b16 %v449
        %v485 = vunpack.c.h.b16 %v449
        %v486 = vunpack.c.l.b16 %v450
        %v487 = vunpack.c.h.b16 %v450
        %v488 = vunpack.c.l.b16 %v451
        %v489 = vunpack.c.h.b16 %v451
        %v490 = vunpack.c.l.b16 %v452
        %v491 = vunpack.c.h.b16 %v452
        %v492 = vunpack.c.l.b16 %v453
        %v493 = vunpack.c.h.b16 %v453
        %v494 = vunpack.c.l.b16 %v454
        %v495 = vunpack.c.h.b16 %v454
        %v496 = vunpack.c.l.b16 %v455
        %v497 = vunpack.c.h.b16 %v455
        %v498 = vunpack.c.l.b16 %v456
        %v499 = vunpack.c.h.b16 %v456
        %v500 = vunpack.c.l.b16 %v457
        %v501 = vunpack.c.h.b16 %v457
        %v502 = vunpack.c.l.b16 %v458
        %v503 = vunpack.c.h.b16 %v458
        %v504 = vunpack.c.l.b16 %v459
        %v505 = vunpack.c.h.b16 %v459
        %v506 = vunpack.c.l.b16 %v460
        %v507 = vunpack.c.h.b16 %v460
        %v508 = vunpack.c.l.b16 %v461
        %v509 = vunpack.c.h.b16 %v461
        %v510 = vpack.c.b16 %v478, %v478
        %v511 = vpack.c.b16 %v479, %v479
        %v512 = vpack.c.b16 %v480, %v480
        %v513 = vpack.c.b16 %v481, %v481
        %v514 = vpack.c.b16 %v482, %v482
        %v515 = vpack.c.b16 %v483, %v483
        %v516 = vpack.c.b16 %v484, %v484
        %v517 = vpack.c.b16 %v485, %v485
        %v518 = vpack.c.b16 %v486, %v486
        %v519 = vpack.c.b16 %v487, %v487
        %v520 = vpack.c.b16 %v488, %v488
        %v521 = vpack.c.b16 %v489, %v489
        %v522 = vpack.c.b16 %v490, %v490
        %v523 = vpack.c.b16 %v491, %v491
        %v524 = vpack.c.b16 %v492, %v492
        %v525 = vpack.c.b16 %v493, %v493
        %v526 = vpack.c.b16 %v494, %v494
        %v527 = vpack.c.b16 %v495, %v495
        %v528 = vpack.c.b16 %v496, %v496
        %v529 = vpack.c.b16 %v497, %v497
        %v530 = vpack.c.b16 %v498, %v498
        %v531 = vpack.c.b16 %v499, %v499
        %v532 = vpack.c.b16 %v500, %v500
        %v533 = vpack.c.b16 %v501, %v501
        %v534 = vpack.c.b16 %v502, %v502
        %v535 = vpack.c.b16 %v503, %v503
        %v536 = vpack.c.b16 %v504, %v504
        %v537 = vpack.c.b16 %v505, %v505
        %v538 = vpack.c.b16 %v506, %v506
        %v539 = vpack.c.b16 %v507, %v507
        %v540 = vpack.c.b16 %v508, %v508
        %v541 = vpack.c.b16 %v509, %v509
        %vm542 = vsmask.f32 256
        %vm543 = vsmask.f32 4368
        %vm544 = vmor %vm542, %vm543
        %v546 = vshrl.u32 %v510, 16
        %v548 = vrot.slane %v546, 7
        %v549 = vshll.u32 %v510, 16
        %v551 = vor.u32 %v548, %v549
        %v552 = vrot.slane %v548, 4
        %v554 = vshrl.u32 %v511, 16
        %v556 = vrot.slane %v554, 7
        %v557 = vshll.u32 %v511, 16
        %v559 = vor.u32 %v556, %v557
        %v560 = vsel %vm544, %v552, %v559
        %v561 = vrot.slane %v556, 4
        %v563 = vshrl.u32 %v512, 16
        %v565 = vrot.slane %v563, 7
        %v566 = vshll.u32 %v512, 16
        %v568 = vor.u32 %v565, %v566
        %v569 = vrot.slane %v565, 4
        %v571 = vshrl.u32 %v513, 16
        %v573 = vrot.slane %v571, 7
        %v574 = vshll.u32 %v513, 16
        %v576 = vor.u32 %v573, %v574
        %v577 = vsel %vm544, %v569, %v576
        %v578 = vrot.slane %v573, 4
        %v580 = vshrl.u32 %v514, 16
        %v582 = vrot.slane %v580, 7
        %v583 = vshll.u32 %v514, 16
        %v585 = vor.u32 %v582, %v583
        %v586 = vrot.slane %v582, 4
        %v588 = vshrl.u32 %v515, 16
        %v590 = vrot.slane %v588, 7
        %v591 = vshll.u32 %v515, 16
        %v593 = vor.u32 %v590, %v591
        %v594 = vsel %vm544, %v586, %v593
        %v595 = vrot.slane %v590, 4
        %v597 = vshrl.u32 %v516, 16
        %v599 = vrot.slane %v597, 7
        %v600 = vshll.u32 %v516, 16
        %v602 = vor.u32 %v599, %v600
        %v603 = vrot.slane %v599, 4
        %v605 = vshrl.u32 %v517, 16
        %v607 = vrot.slane %v605, 7
        %v608 = vshll.u32 %v517, 16
        %v610 = vor.u32 %v607, %v608
        %v611 = vsel %vm544, %v603, %v610
        %v612 = vrot.slane %v607, 4
        %v614 = vshrl.u32 %v518, 16
        %v616 = vrot.slane %v614, 7
        %v617 = vshll.u32 %v518, 16
        %v619 = vor.u32 %v616, %v617
        %v620 = vrot.slane %v616, 4
        %v622 = vshrl.u32 %v519, 16
        %v624 = vrot.slane %v622, 7
        %v625 = vshll.u32 %v519, 16
        %v627 = vor.u32 %v624, %v625
        %v628 = vsel %vm544, %v620, %v627
        %v629 = vrot.slane %v624, 4
        %v631 = vshrl.u32 %v520, 16
        %v633 = vrot.slane %v631, 7
        %v634 = vshll.u32 %v520, 16
        %v636 = vor.u32 %v633, %v634
        %v637 = vrot.slane %v633, 4
        %v639 = vshrl.u32 %v521, 16
        %v641 = vrot.slane %v639, 7
        %v642 = vshll.u32 %v521, 16
        %v644 = vor.u32 %v641, %v642
        %v645 = vsel %vm544, %v637, %v644
        %v646 = vrot.slane %v641, 4
        %v648 = vshrl.u32 %v522, 16
        %v650 = vrot.slane %v648, 7
        %v651 = vshll.u32 %v522, 16
        %v653 = vor.u32 %v650, %v651
        %v654 = vrot.slane %v650, 4
        %v656 = vshrl.u32 %v523, 16
        %v658 = vrot.slane %v656, 7
        %v659 = vshll.u32 %v523, 16
        %v661 = vor.u32 %v658, %v659
        %v662 = vsel %vm544, %v654, %v661
        %v663 = vrot.slane %v658, 4
        %v665 = vshrl.u32 %v524, 16
        %v667 = vrot.slane %v665, 7
        %v668 = vshll.u32 %v524, 16
        %v670 = vor.u32 %v667, %v668
        %v671 = vrot.slane %v667, 4
        %v673 = vshrl.u32 %v525, 16
        %v675 = vrot.slane %v673, 7
        %v676 = vshll.u32 %v525, 16
        %v678 = vor.u32 %v675, %v676
        %v679 = vsel %vm544, %v671, %v678
        %v680 = vrot.slane %v675, 4
        %v682 = vshrl.u32 %v526, 16
        %v684 = vrot.slane %v682, 7
        %v685 = vshll.u32 %v526, 16
        %v687 = vor.u32 %v684, %v685
        %v688 = vrot.slane %v684, 4
        %v690 = vshrl.u32 %v527, 16
        %v692 = vrot.slane %v690, 7
        %v693 = vshll.u32 %v527, 16
        %v695 = vor.u32 %v692, %v693
        %v696 = vsel %vm544, %v688, %v695
        %v697 = vrot.slane %v692, 4
        %v699 = vshrl.u32 %v528, 16
        %v701 = vrot.slane %v699, 7
        %v702 = vshll.u32 %v528, 16
        %v704 = vor.u32 %v701, %v702
        %v705 = vrot.slane %v701, 4
        %v707 = vshrl.u32 %v529, 16
        %v709 = vrot.slane %v707, 7
        %v710 = vshll.u32 %v529, 16
        %v712 = vor.u32 %v709, %v710
        %v713 = vsel %vm544, %v705, %v712
        %v714 = vrot.slane %v709, 4
        %v716 = vshrl.u32 %v530, 16
        %v718 = vrot.slane %v716, 7
        %v719 = vshll.u32 %v530, 16
        %v721 = vor.u32 %v718, %v719
        %v722 = vrot.slane %v718, 4
        %v724 = vshrl.u32 %v531, 16
        %v726 = vrot.slane %v724, 7
        %v727 = vshll.u32 %v531, 16
        %v729 = vor.u32 %v726, %v727
        %v730 = vsel %vm544, %v722, %v729
        %v731 = vrot.slane %v726, 4
        %v733 = vshrl.u32 %v532, 16
        %v735 = vrot.slane %v733, 7
        %v736 = vshll.u32 %v532, 16
        %v738 = vor.u32 %v735, %v736
        %v739 = vrot.slane %v735, 4
        %v741 = vshrl.u32 %v533, 16
        %v743 = vrot.slane %v741, 7
        %v744 = vshll.u32 %v533, 16
        %v746 = vor.u32 %v743, %v744
        %v747 = vsel %vm544, %v739, %v746
        %v748 = vrot.slane %v743, 4
        %v750 = vshrl.u32 %v534, 16
        %v752 = vrot.slane %v750, 7
        %v753 = vshll.u32 %v534, 16
        %v755 = vor.u32 %v752, %v753
        %v756 = vrot.slane %v752, 4
        %v758 = vshrl.u32 %v535, 16
        %v760 = vrot.slane %v758, 7
        %v761 = vshll.u32 %v535, 16
        %v763 = vor.u32 %v760, %v761
        %v764 = vsel %vm544, %v756, %v763
        %v765 = vrot.slane %v760, 4
        %v767 = vshrl.u32 %v536, 16
        %v769 = vrot.slane %v767, 7
        %v770 = vshll.u32 %v536, 16
        %v772 = vor.u32 %v769, %v770
        %v773 = vrot.slane %v769, 4
        %v775 = vshrl.u32 %v537, 16
        %v777 = vrot.slane %v775, 7
        %v778 = vshll.u32 %v537, 16
        %v780 = vor.u32 %v777, %v778
        %v781 = vsel %vm544, %v773, %v780
        %v782 = vrot.slane %v777, 4
        %v784 = vshrl.u32 %v538, 16
        %v786 = vrot.slane %v784, 7
        %v787 = vshll.u32 %v538, 16
        %v789 = vor.u32 %v786, %v787
        %v790 = vrot.slane %v786, 4
        %v792 = vshrl.u32 %v539, 16
        %v794 = vrot.slane %v792, 7
        %v795 = vshll.u32 %v539, 16
        %v797 = vor.u32 %v794, %v795
        %v798 = vsel %vm544, %v790, %v797
        %v799 = vrot.slane %v794, 4
        %v801 = vshrl.u32 %v540, 16
        %v803 = vrot.slane %v801, 7
        %v804 = vshll.u32 %v540, 16
        %v806 = vor.u32 %v803, %v804
        %v807 = vrot.slane %v803, 4
        %v809 = vshrl.u32 %v541, 16
        %v811 = vrot.slane %v809, 7
        %v812 = vshll.u32 %v541, 16
        %v814 = vor.u32 %v811, %v812
        %v815 = vsel %vm544, %v807, %v814
        %v816 = vrot.slane %v811, 4
        %s865 = scalar_lea.vmem [#allocation2], 12
        %vm866 = vcmask 1043456
        %vm867 = vsmask.f32 7938
        %vm868 = vmand %vm866, %vm867
        %v869 = vld [vmem:[%s865] sm:$0xf]
        %v870 = vsel %vm868, %v551, %v869
        %871 = vst [vmem:[%s865] sm:$0xf] %v870
        %872 = vst [vmem:[%s865 + $0x4] sm:$0xf] %v560
        %vm873 = vcmask 1040384
        %vm874 = vmand %vm873, %vm542
        %v875 = vld [vmem:[%s865 + $0x8] sm:$0x1]
        %v876 = vsel %vm874, %v561, %v875
        %877 = vst [vmem:[%s865 + $0x8] sm:$0x1] %v876
        %v878 = vld [vmem:[%s865 + $0xc] sm:$0xf]
        %v879 = vsel %vm868, %v568, %v878
        %880 = vst [vmem:[%s865 + $0xc] sm:$0xf] %v879
        %881 = vst [vmem:[%s865 + $0x10] sm:$0xf] %v577
        %v882 = vld [vmem:[%s865 + $0x14] sm:$0x1]
        %v883 = vsel %vm874, %v578, %v882
        %884 = vst [vmem:[%s865 + $0x14] sm:$0x1] %v883
        %v885 = vld [vmem:[%s865 + $0x18] sm:$0xf]
        %v886 = vsel %vm868, %v585, %v885
        %887 = vst [vmem:[%s865 + $0x18] sm:$0xf] %v886
        %888 = vst [vmem:[%s865 + $0x1c] sm:$0xf] %v594
        %v889 = vld [vmem:[%s865 + $0x20] sm:$0x1]
        %v890 = vsel %vm874, %v595, %v889
        %891 = vst [vmem:[%s865 + $0x20] sm:$0x1] %v890
        %v892 = vld [vmem:[%s865 + $0x24] sm:$0xf]
        %v893 = vsel %vm868, %v602, %v892
        %894 = vst [vmem:[%s865 + $0x24] sm:$0xf] %v893
        %895 = vst [vmem:[%s865 + $0x28] sm:$0xf] %v611
        %v896 = vld [vmem:[%s865 + $0x2c] sm:$0x1]
        %v897 = vsel %vm874, %v612, %v896
        %898 = vst [vmem:[%s865 + $0x2c] sm:$0x1] %v897
        %v899 = vld [vmem:[%s865 + $0x30] sm:$0xf]
        %v900 = vsel %vm868, %v619, %v899
        %901 = vst [vmem:[%s865 + $0x30] sm:$0xf] %v900
        %902 = vst [vmem:[%s865 + $0x34] sm:$0xf] %v628
        %v903 = vld [vmem:[%s865 + $0x38] sm:$0x1]
        %v904 = vsel %vm874, %v629, %v903
        %905 = vst [vmem:[%s865 + $0x38] sm:$0x1] %v904
        %v906 = vld [vmem:[%s865 + $0x3c] sm:$0xf]
        %v907 = vsel %vm868, %v636, %v906
        %908 = vst [vmem:[%s865 + $0x3c] sm:$0xf] %v907
        %909 = vst [vmem:[%s865 + $0x40] sm:$0xf] %v645
        %v910 = vld [vmem:[%s865 + $0x44] sm:$0x1]
        %v911 = vsel %vm874, %v646, %v910
        %912 = vst [vmem:[%s865 + $0x44] sm:$0x1] %v911
        %v913 = vld [vmem:[%s865 + $0x48] sm:$0xf]
        %v914 = vsel %vm868, %v653, %v913
        %915 = vst [vmem:[%s865 + $0x48] sm:$0xf] %v914
        %916 = vst [vmem:[%s865 + $0x4c] sm:$0xf] %v662
        %v917 = vld [vmem:[%s865 + $0x50] sm:$0x1]
        %v918 = vsel %vm874, %v663, %v917
        %919 = vst [vmem:[%s865 + $0x50] sm:$0x1] %v918
        %v920 = vld [vmem:[%s865 + $0x54] sm:$0xf]
        %v921 = vsel %vm868, %v670, %v920
        %922 = vst [vmem:[%s865 + $0x54] sm:$0xf] %v921
        %923 = vst [vmem:[%s865 + $0x58] sm:$0xf] %v679
        %v924 = vld [vmem:[%s865 + $0x5c] sm:$0x1]
        %v925 = vsel %vm874, %v680, %v924
        %926 = vst [vmem:[%s865 + $0x5c] sm:$0x1] %v925
        %v927 = vld [vmem:[%s865 + $0x60] sm:$0xf]
        %v928 = vsel %vm868, %v687, %v927
        %929 = vst [vmem:[%s865 + $0x60] sm:$0xf] %v928
        %930 = vst [vmem:[%s865 + $0x64] sm:$0xf] %v696
        %v931 = vld [vmem:[%s865 + $0x68] sm:$0x1]
        %v932 = vsel %vm874, %v697, %v931
        %933 = vst [vmem:[%s865 + $0x68] sm:$0x1] %v932
        %v934 = vld [vmem:[%s865 + $0x6c] sm:$0xf]
        %v935 = vsel %vm868, %v704, %v934
        %936 = vst [vmem:[%s865 + $0x6c] sm:$0xf] %v935
        %937 = vst [vmem:[%s865 + $0x70] sm:$0xf] %v713
        %v938 = vld [vmem:[%s865 + $0x74] sm:$0x1]
        %v939 = vsel %vm874, %v714, %v938
        %940 = vst [vmem:[%s865 + $0x74] sm:$0x1] %v939
        %v941 = vld [vmem:[%s865 + $0x78] sm:$0xf]
        %v942 = vsel %vm868, %v721, %v941
        %943 = vst [vmem:[%s865 + $0x78] sm:$0xf] %v942
        %944 = vst [vmem:[%s865 + $0x7c] sm:$0xf] %v730
        %v945 = vld [vmem:[%s865 + $0x80] sm:$0x1]
        %v946 = vsel %vm874, %v731, %v945
        %947 = vst [vmem:[%s865 + $0x80] sm:$0x1] %v946
        %v948 = vld [vmem:[%s865 + $0x84] sm:$0xf]
        %v949 = vsel %vm868, %v738, %v948
        %950 = vst [vmem:[%s865 + $0x84] sm:$0xf] %v949
        %951 = vst [vmem:[%s865 + $0x88] sm:$0xf] %v747
        %v952 = vld [vmem:[%s865 + $0x8c] sm:$0x1]
        %v953 = vsel %vm874, %v748, %v952
        %954 = vst [vmem:[%s865 + $0x8c] sm:$0x1] %v953
        %v955 = vld [vmem:[%s865 + $0x90] sm:$0xf]
        %v956 = vsel %vm868, %v755, %v955
        %957 = vst [vmem:[%s865 + $0x90] sm:$0xf] %v956
        %958 = vst [vmem:[%s865 + $0x94] sm:$0xf] %v764
        %v959 = vld [vmem:[%s865 + $0x98] sm:$0x1]
        %v960 = vsel %vm874, %v765, %v959
        %961 = vst [vmem:[%s865 + $0x98] sm:$0x1] %v960
        %v962 = vld [vmem:[%s865 + $0x9c] sm:$0xf]
        %v963 = vsel %vm868, %v772, %v962
        %964 = vst [vmem:[%s865 + $0x9c] sm:$0xf] %v963
        %965 = vst [vmem:[%s865 + $0xa0] sm:$0xf] %v781
        %v966 = vld [vmem:[%s865 + $0xa4] sm:$0x1]
        %v967 = vsel %vm874, %v782, %v966
        %968 = vst [vmem:[%s865 + $0xa4] sm:$0x1] %v967
        %v969 = vld [vmem:[%s865 + $0xa8] sm:$0xf]
        %v970 = vsel %vm868, %v789, %v969
        %971 = vst [vmem:[%s865 + $0xa8] sm:$0xf] %v970
        %972 = vst [vmem:[%s865 + $0xac] sm:$0xf] %v798
        %v973 = vld [vmem:[%s865 + $0xb0] sm:$0x1]
        %v974 = vsel %vm874, %v799, %v973
        %975 = vst [vmem:[%s865 + $0xb0] sm:$0x1] %v974
        %v976 = vld [vmem:[%s865 + $0xb4] sm:$0xf]
        %v977 = vsel %vm868, %v806, %v976
        %978 = vst [vmem:[%s865 + $0xb4] sm:$0xf] %v977
        %979 = vst [vmem:[%s865 + $0xb8] sm:$0xf] %v815
        %v980 = vld [vmem:[%s865 + $0xbc] sm:$0x1]
        %v981 = vsel %vm874, %v816, %v980
        %982 = vst [vmem:[%s865 + $0xbc] sm:$0x1] %v981
        %v983 = vld [vmem:[#allocation2] sm:$0x1]
        %v984 = vsel %vm874, 0, %v983
        %985 = vst [vmem:[#allocation2] sm:$0x1] %v984
        %v986 = vld [vmem:[#allocation2 + $0xc] sm:$0x1]
        %v987 = vsel %vm874, 0, %v986
        %988 = vst [vmem:[#allocation2 + $0xc] sm:$0x1] %v987
        %v989 = vld [vmem:[#allocation2 + $0x18] sm:$0x1]
        %v990 = vsel %vm874, 0, %v989
        %991 = vst [vmem:[#allocation2 + $0x18] sm:$0x1] %v990
        %v992 = vld [vmem:[#allocation2 + $0x24] sm:$0x1]
        %v993 = vsel %vm874, 0, %v992
        %994 = vst [vmem:[#allocation2 + $0x24] sm:$0x1] %v993
        %v995 = vld [vmem:[#allocation2 + $0x30] sm:$0x1]
        %v996 = vsel %vm874, 0, %v995
        %997 = vst [vmem:[#allocation2 + $0x30] sm:$0x1] %v996
        %v998 = vld [vmem:[#allocation2 + $0x3c] sm:$0x1]
        %v999 = vsel %vm874, 0, %v998
        %1000 = vst [vmem:[#allocation2 + $0x3c] sm:$0x1] %v999
        %v1001 = vld [vmem:[#allocation2 + $0x48] sm:$0x1]
        %v1002 = vsel %vm874, 0, %v1001
        %1003 = vst [vmem:[#allocation2 + $0x48] sm:$0x1] %v1002
        %v1004 = vld [vmem:[#allocation2 + $0x54] sm:$0x1]
        %v1005 = vsel %vm874, 0, %v1004
        %1006 = vst [vmem:[#allocation2 + $0x54] sm:$0x1] %v1005
        %v1007 = vld [vmem:[#allocation2 + $0x60] sm:$0x1]
        %v1008 = vsel %vm874, 0, %v1007
        %1009 = vst [vmem:[#allocation2 + $0x60] sm:$0x1] %v1008
        %v1010 = vld [vmem:[#allocation2 + $0x6c] sm:$0x1]
        %v1011 = vsel %vm874, 0, %v1010
        %1012 = vst [vmem:[#allocation2 + $0x6c] sm:$0x1] %v1011
        %v1013 = vld [vmem:[#allocation2 + $0x78] sm:$0x1]
        %v1014 = vsel %vm874, 0, %v1013
        %1015 = vst [vmem:[#allocation2 + $0x78] sm:$0x1] %v1014
        %v1016 = vld [vmem:[#allocation2 + $0x84] sm:$0x1]
        %v1017 = vsel %vm874, 0, %v1016
        %1018 = vst [vmem:[#allocation2 + $0x84] sm:$0x1] %v1017
        %v1019 = vld [vmem:[#allocation2 + $0x90] sm:$0x1]
        %v1020 = vsel %vm874, 0, %v1019
        %1021 = vst [vmem:[#allocation2 + $0x90] sm:$0x1] %v1020
        %v1022 = vld [vmem:[#allocation2 + $0x9c] sm:$0x1]
        %v1023 = vsel %vm874, 0, %v1022
        %1024 = vst [vmem:[#allocation2 + $0x9c] sm:$0x1] %v1023
        %v1025 = vld [vmem:[#allocation2 + $0xa8] sm:$0x1]
        %v1026 = vsel %vm874, 0, %v1025
        %1027 = vst [vmem:[#allocation2 + $0xa8] sm:$0x1] %v1026
        %v1028 = vld [vmem:[#allocation2 + $0xb4] sm:$0x1]
        %v1029 = vsel %vm874, 0, %v1028
        %1030 = vst [vmem:[#allocation2 + $0xb4] sm:$0x1] %v1029
        %v1031 = vld [vmem:[#allocation2 + $0xc0] sm:$0x1]
        %v1032 = vsel %vm874, 0, %v1031
        %1033 = vst [vmem:[#allocation2 + $0xc0] sm:$0x1] %v1032
        %v1034 = vld [vmem:[#allocation2 + $0xcc] sm:$0x1]
        %v1035 = vsel %vm874, 0, %v1034
        %1036 = vst [vmem:[#allocation2 + $0xcc] sm:$0x1] %v1035
        %vm1037 = vmand %vm873, %vm867
        %v1038 = vld [vmem:[#allocation2 + $0x8] sm:$0x1]
        %v1039 = vsel %vm1037, 0, %v1038
        %1040 = vst [vmem:[#allocation2 + $0x8] sm:$0x1] %v1039
        %v1041 = vld [vmem:[#allocation2 + $0x14] sm:$0x1]
        %v1042 = vsel %vm1037, 0, %v1041
        %1043 = vst [vmem:[#allocation2 + $0x14] sm:$0x1] %v1042
        %v1044 = vld [vmem:[#allocation2 + $0x20] sm:$0x1]
        %v1045 = vsel %vm1037, 0, %v1044
        %1046 = vst [vmem:[#allocation2 + $0x20] sm:$0x1] %v1045
        %v1047 = vld [vmem:[#allocation2 + $0x2c] sm:$0x1]
        %v1048 = vsel %vm1037, 0, %v1047
        %1049 = vst [vmem:[#allocation2 + $0x2c] sm:$0x1] %v1048
        %v1050 = vld [vmem:[#allocation2 + $0x38] sm:$0x1]
        %v1051 = vsel %vm1037, 0, %v1050
        %1052 = vst [vmem:[#allocation2 + $0x38] sm:$0x1] %v1051
        %v1053 = vld [vmem:[#allocation2 + $0x44] sm:$0x1]
        %v1054 = vsel %vm1037, 0, %v1053
        %1055 = vst [vmem:[#allocation2 + $0x44] sm:$0x1] %v1054
        %v1056 = vld [vmem:[#allocation2 + $0x50] sm:$0x1]
        %v1057 = vsel %vm1037, 0, %v1056
        %1058 = vst [vmem:[#allocation2 + $0x50] sm:$0x1] %v1057
        %v1059 = vld [vmem:[#allocation2 + $0x5c] sm:$0x1]
        %v1060 = vsel %vm1037, 0, %v1059
        %1061 = vst [vmem:[#allocation2 + $0x5c] sm:$0x1] %v1060
        %v1062 = vld [vmem:[#allocation2 + $0x68] sm:$0x1]
        %v1063 = vsel %vm1037, 0, %v1062
        %1064 = vst [vmem:[#allocation2 + $0x68] sm:$0x1] %v1063
        %v1065 = vld [vmem:[#allocation2 + $0x74] sm:$0x1]
        %v1066 = vsel %vm1037, 0, %v1065
        %1067 = vst [vmem:[#allocation2 + $0x74] sm:$0x1] %v1066
        %v1068 = vld [vmem:[#allocation2 + $0x80] sm:$0x1]
        %v1069 = vsel %vm1037, 0, %v1068
        %1070 = vst [vmem:[#allocation2 + $0x80] sm:$0x1] %v1069
        %v1071 = vld [vmem:[#allocation2 + $0x8c] sm:$0x1]
        %v1072 = vsel %vm1037, 0, %v1071
        %1073 = vst [vmem:[#allocation2 + $0x8c] sm:$0x1] %v1072
        %v1074 = vld [vmem:[#allocation2 + $0x98] sm:$0x1]
        %v1075 = vsel %vm1037, 0, %v1074
        %1076 = vst [vmem:[#allocation2 + $0x98] sm:$0x1] %v1075
        %v1077 = vld [vmem:[#allocation2 + $0xa4] sm:$0x1]
        %v1078 = vsel %vm1037, 0, %v1077
        %1079 = vst [vmem:[#allocation2 + $0xa4] sm:$0x1] %v1078
        %v1080 = vld [vmem:[#allocation2 + $0xb0] sm:$0x1]
        %v1081 = vsel %vm1037, 0, %v1080
        %1082 = vst [vmem:[#allocation2 + $0xb0] sm:$0x1] %v1081
        %v1083 = vld [vmem:[#allocation2 + $0xbc] sm:$0x1]
        %v1084 = vsel %vm1037, 0, %v1083
        %1085 = vst [vmem:[#allocation2 + $0xbc] sm:$0x1] %v1084
        %v1086 = vld [vmem:[#allocation2 + $0xc8] sm:$0x1]
        %v1087 = vsel %vm1037, 0, %v1086
        %1088 = vst [vmem:[#allocation2 + $0xc8] sm:$0x1] %v1087
        %v1089 = vld [vmem:[#allocation2 + $0xd4] sm:$0x1]
        %v1090 = vsel %vm1037, 0, %v1089
        %1091 = vst [vmem:[#allocation2 + $0xd4] sm:$0x1] %v1090
        %p1092 = scmp.gt.s32.totalorder %s30, 0
        // Predicated region
        $region53: #{tpu_custom_call.1} parent=39 // pred_check
          %p1093 = pneg %p1092
        $region54: #{tpu_custom_call.1} parent=39 // pred_check_branch
          %1095 = sbr.rel (%p1093) target = $region56
        $region55: #{tpu_custom_call.1} parent=39 // pred_region
          %v1096 = vld [vmem:[%s325] sm:$0xff]
          %v1097 = vld [vmem:[%s325 + $0x8] sm:$0xff]
          %v1098 = vmax.f32 %v1096, 0.0
          %v1099 = vmax.f32 %v1097, 0.0
          %v1100 = vpack.c.bf16 %v1099, %v1098
          %v1102 = vunpack.c.l.b16 %v1100
          %v1103 = vunpack.c.h.b16 %v1100
          %v1104 = vpack.c.b16 %v1102, %v1102
          %v1105 = vpack.c.b16 %v1103, %v1103
          %v1107 = vshrl.u32 %v1104, 16
          %v1109 = vrot.slane %v1107, 7
          %v1110 = vshll.u32 %v1104, 16
          %v1112 = vor.u32 %v1109, %v1110
          %v1113 = vrot.slane %v1109, 4
          %v1115 = vshrl.u32 %v1105, 16
          %v1117 = vrot.slane %v1115, 7
          %v1118 = vshll.u32 %v1105, 16
          %v1120 = vor.u32 %v1117, %v1118
          %v1121 = vsel %vm544, %v1113, %v1120
          %v1122 = vrot.slane %v1117, 4
          %v1126 = vld [vmem:[#allocation2] sm:$0xf]
          %v1127 = vsel %vm868, %v1112, %v1126
          %1128 = vst [vmem:[#allocation2] sm:$0xf] %v1127
          %1129 = vst [vmem:[#allocation2 + $0x4] sm:$0xf] %v1121
          %v1130 = vld [vmem:[#allocation2 + $0x8] sm:$0x1]
          %v1131 = vsel %vm874, %v1122, %v1130
          %1132 = vst [vmem:[#allocation2 + $0x8] sm:$0x1] %v1131
        $region56: #{tpu_custom_call.1} parent=39 // pred_fallthru
          _
        %p1133 = scmp.eq.s32.totalorder %s30, 0
        // Predicated region
        $region57: #{tpu_custom_call.1} parent=39 // pred_check
          %p1134 = pneg %p1133
        $region58: #{tpu_custom_call.1} parent=39 // pred_check_branch
          %1136 = sbr.rel (%p1134) target = $region60
        $region59: #{tpu_custom_call.1} parent=39 // pred_region
          %v1137 = vld [vmem:[#allocation2] sm:$0xf]
          %v1138 = vsel %vm868, 0, %v1137
          %1139 = vst [vmem:[#allocation2] sm:$0xf] %v1138
          %1140 = vst [vmem:[#allocation2 + $0x4] sm:$0xf] 0
          %v1141 = vld [vmem:[#allocation2 + $0x8] sm:$0x1]
          %v1142 = vsel %vm874, 0, %v1141
          %1143 = vst [vmem:[#allocation2 + $0x8] sm:$0x1] %v1142
        $region60: #{tpu_custom_call.1} parent=39 // pred_fallthru
          _
        %p1144 = scmp.lt.s32.totalorder %s30, 0
        // Predicated region
        $region61: #{tpu_custom_call.1} parent=39 // pred_check
          %p1145 = pneg %p1144
        $region62: #{tpu_custom_call.1} parent=39 // pred_check_branch
          %1147 = sbr.rel (%p1145) target = $region64
        $region63: #{tpu_custom_call.1} parent=39 // pred_region
          %v1148 = vld [vmem:[%s334] sm:$0xff]
          %v1149 = vld [vmem:[%s334 + $0x8] sm:$0xff]
          %v1150 = vmax.f32 %v1148, 0.0
          %v1151 = vmax.f32 %v1149, 0.0
          %v1152 = vpack.c.bf16 %v1151, %v1150
          %v1154 = vunpack.c.l.b16 %v1152
          %v1155 = vunpack.c.h.b16 %v1152
          %v1156 = vpack.c.b16 %v1154, %v1154
          %v1157 = vpack.c.b16 %v1155, %v1155
          %v1159 = vshrl.u32 %v1156, 16
          %v1161 = vrot.slane %v1159, 7
          %v1162 = vshll.u32 %v1156, 16
          %v1164 = vor.u32 %v1161, %v1162
          %v1165 = vrot.slane %v1161, 4
          %v1167 = vshrl.u32 %v1157, 16
          %v1169 = vrot.slane %v1167, 7
          %v1170 = vshll.u32 %v1157, 16
          %v1172 = vor.u32 %v1169, %v1170
          %v1173 = vsel %vm544, %v1165, %v1172
          %v1174 = vrot.slane %v1169, 4
          %s1178 = scalar_lea.vmem [#allocation2], 204
          %v1179 = vld [vmem:[%s1178] sm:$0xf]
          %v1180 = vsel %vm868, %v1164, %v1179
          %1181 = vst [vmem:[%s1178] sm:$0xf] %v1180
          %1182 = vst [vmem:[%s1178 + $0x4] sm:$0xf] %v1173
          %v1183 = vld [vmem:[%s1178 + $0x8] sm:$0x1]
          %v1184 = vsel %vm874, %v1174, %v1183
          %1185 = vst [vmem:[%s1178 + $0x8] sm:$0x1] %v1184
        $region64: #{tpu_custom_call.1} parent=39 // pred_fallthru
          _
        // Predicated region
        $region65: #{tpu_custom_call.1} parent=39 // pred_check
          %p1186 = pneg %p1133
        $region66: #{tpu_custom_call.1} parent=39 // pred_check_branch
          %1188 = sbr.rel (%p1186) target = $region68
        $region67: #{tpu_custom_call.1} parent=39 // pred_region
          %s1189 = scalar_lea.vmem [#allocation2], 204
          %v1190 = vld [vmem:[%s1189] sm:$0xf]
          %v1191 = vsel %vm868, 0, %v1190
          %1192 = vst [vmem:[%s1189] sm:$0xf] %v1191
          %1193 = vst [vmem:[%s1189 + $0x4] sm:$0xf] 0
          %v1194 = vld [vmem:[%s1189 + $0x8] sm:$0x1]
          %v1195 = vsel %vm874, 0, %v1194
          %1196 = vst [vmem:[%s1189 + $0x8] sm:$0x1] %v1195
        $region68: #{tpu_custom_call.1} parent=39 // pred_fallthru
          _
        %v1197 = vld [vmem:[#allocation2] sm:$0xf]
        %v1198 = vld [vmem:[#allocation2 + $0x4] sm:$0xf]
        %v1199 = vld [vmem:[#allocation2 + $0x8] sm:$0x1]
        %v1200 = vld [vmem:[#allocation2 + $0xc] sm:$0xf]
        %v1201 = vld [vmem:[#allocation2 + $0x10] sm:$0xf]
        %v1202 = vld [vmem:[#allocation2 + $0x14] sm:$0x1]
        %v1203 = vld [vmem:[#allocation2 + $0x18] sm:$0xf]
        %v1204 = vld [vmem:[#allocation2 + $0x1c] sm:$0xf]
        %v1205 = vld [vmem:[#allocation2 + $0x20] sm:$0x1]
        %v1206 = vld [vmem:[#allocation2 + $0x24] sm:$0xf]
        %v1207 = vld [vmem:[#allocation2 + $0x28] sm:$0xf]
        %v1208 = vld [vmem:[#allocation2 + $0x2c] sm:$0x1]
        %v1209 = vld [vmem:[#allocation2 + $0x30] sm:$0xf]
        %v1210 = vld [vmem:[#allocation2 + $0x34] sm:$0xf]
        %v1211 = vld [vmem:[#allocation2 + $0x38] sm:$0x1]
        %v1212 = vld [vmem:[#allocation2 + $0x3c] sm:$0xf]
        %v1213 = vld [vmem:[#allocation2 + $0x40] sm:$0xf]
        %v1214 = vld [vmem:[#allocation2 + $0x44] sm:$0x1]
        %v1215 = vld [vmem:[#allocation2 + $0x48] sm:$0xf]
        %v1216 = vld [vmem:[#allocation2 + $0x4c] sm:$0xf]
        %v1217 = vld [vmem:[#allocation2 + $0x50] sm:$0x1]
        %v1218 = vld [vmem:[#allocation2 + $0x54] sm:$0xf]
        %v1219 = vld [vmem:[#allocation2 + $0x58] sm:$0xf]
        %v1220 = vld [vmem:[#allocation2 + $0x5c] sm:$0x1]
        %v1221 = vld [vmem:[#allocation2 + $0x60] sm:$0xf]
        %v1222 = vld [vmem:[#allocation2 + $0x64] sm:$0xf]
        %v1223 = vld [vmem:[#allocation2 + $0x68] sm:$0x1]
        %v1224 = vld [vmem:[#allocation2 + $0x6c] sm:$0xf]
        %v1225 = vld [vmem:[#allocation2 + $0x70] sm:$0xf]
        %v1226 = vld [vmem:[#allocation2 + $0x74] sm:$0x1]
        %v1227 = vld [vmem:[#allocation2 + $0x78] sm:$0xf]
        %v1228 = vld [vmem:[#allocation2 + $0x7c] sm:$0xf]
        %v1229 = vld [vmem:[#allocation2 + $0x80] sm:$0x1]
        %v1230 = vld [vmem:[#allocation2 + $0x84] sm:$0xf]
        %v1231 = vld [vmem:[#allocation2 + $0x88] sm:$0xf]
        %v1232 = vld [vmem:[#allocation2 + $0x8c] sm:$0x1]
        %v1233 = vld [vmem:[#allocation2 + $0x90] sm:$0xf]
        %v1234 = vld [vmem:[#allocation2 + $0x94] sm:$0xf]
        %v1235 = vld [vmem:[#allocation2 + $0x98] sm:$0x1]
        %v1236 = vld [vmem:[#allocation2 + $0x9c] sm:$0xf]
        %v1237 = vld [vmem:[#allocation2 + $0xa0] sm:$0xf]
        %v1238 = vld [vmem:[#allocation2 + $0xa4] sm:$0x1]
        %v1239 = vld [vmem:[#allocation2 + $0xa8] sm:$0xf]
        %v1240 = vld [vmem:[#allocation2 + $0xac] sm:$0xf]
        %v1241 = vld [vmem:[#allocation2 + $0xb0] sm:$0x1]
        %v1242 = vld [vmem:[#allocation2 + $0xb4] sm:$0xf]
        %v1243 = vld [vmem:[#allocation2 + $0xb8] sm:$0xf]
        %v1244 = vld [vmem:[#allocation2 + $0xbc] sm:$0x1]
        %v1245 = vld [vmem:[#allocation2 + $0xc0] sm:$0xf]
        %v1246 = vld [vmem:[#allocation2 + $0xc4] sm:$0xf]
        %v1247 = vld [vmem:[#allocation2 + $0xc8] sm:$0x1]
        %v1248 = vld [vmem:[#allocation2 + $0xcc] sm:$0xf]
        %v1249 = vld [vmem:[#allocation2 + $0xd0] sm:$0xf]
        %v1250 = vld [vmem:[#allocation2 + $0xd4] sm:$0x1]
        %v1287 = vunpack.c.l.b16 %v1197
        %v1288 = vunpack.c.l.b16 %v1198
        %v1289 = vunpack.c.l.b16 %v1200
        %v1290 = vunpack.c.l.b16 %v1201
        %v1291 = vunpack.c.l.b16 %v1203
        %v1292 = vunpack.c.l.b16 %v1204
        %v1293 = vunpack.c.l.b16 %v1206
        %v1294 = vunpack.c.l.b16 %v1207
        %v1295 = vunpack.c.l.b16 %v1209
        %v1296 = vunpack.c.l.b16 %v1210
        %v1297 = vunpack.c.l.b16 %v1212
        %v1298 = vunpack.c.l.b16 %v1213
        %v1299 = vunpack.c.l.b16 %v1215
        %v1300 = vunpack.c.l.b16 %v1216
        %v1301 = vunpack.c.l.b16 %v1218
        %v1302 = vunpack.c.l.b16 %v1219
        %v1303 = vunpack.c.l.b16 %v1221
        %v1304 = vunpack.c.l.b16 %v1222
        %v1305 = vunpack.c.l.b16 %v1224
        %v1306 = vunpack.c.l.b16 %v1225
        %v1307 = vunpack.c.l.b16 %v1227
        %v1308 = vunpack.c.l.b16 %v1228
        %v1309 = vunpack.c.l.b16 %v1230
        %v1310 = vunpack.c.l.b16 %v1231
        %v1311 = vunpack.c.l.b16 %v1233
        %v1312 = vunpack.c.l.b16 %v1234
        %v1313 = vunpack.c.l.b16 %v1236
        %v1314 = vunpack.c.l.b16 %v1237
        %v1315 = vunpack.c.l.b16 %v1239
        %v1316 = vunpack.c.l.b16 %v1240
        %v1317 = vunpack.c.l.b16 %v1242
        %v1318 = vunpack.c.l.b16 %v1243
        %v1319 = vunpack.c.l.b16 %v1245
        %v1320 = vunpack.c.l.b16 %v1246
        %v1321 = vunpack.c.l.b16 %v1248
        %v1322 = vunpack.c.l.b16 %v1249
        %v1323 = vpack.c.b16 %v1288, %v1287
        %v1324 = vpack.c.b16 %v1290, %v1289
        %v1325 = vpack.c.b16 %v1292, %v1291
        %v1326 = vpack.c.b16 %v1294, %v1293
        %v1327 = vpack.c.b16 %v1296, %v1295
        %v1328 = vpack.c.b16 %v1298, %v1297
        %v1329 = vpack.c.b16 %v1300, %v1299
        %v1330 = vpack.c.b16 %v1302, %v1301
        %v1331 = vpack.c.b16 %v1304, %v1303
        %v1332 = vpack.c.b16 %v1306, %v1305
        %v1333 = vpack.c.b16 %v1308, %v1307
        %v1334 = vpack.c.b16 %v1310, %v1309
        %v1335 = vpack.c.b16 %v1312, %v1311
        %v1336 = vpack.c.b16 %v1314, %v1313
        %v1337 = vpack.c.b16 %v1316, %v1315
        %v1338 = vpack.c.b16 %v1318, %v1317
        %v1339 = vpack.c.b16 %v1320, %v1319
        %v1340 = vpack.c.b16 %v1322, %v1321
        %v1377 = vunpack.c.l.b16 %v1199
        %v1378 = vunpack.c.l.b16 %v1202
        %v1379 = vunpack.c.l.b16 %v1205
        %v1380 = vunpack.c.l.b16 %v1208
        %v1381 = vunpack.c.l.b16 %v1211
        %v1382 = vunpack.c.l.b16 %v1214
        %v1383 = vunpack.c.l.b16 %v1217
        %v1384 = vunpack.c.l.b16 %v1220
        %v1385 = vunpack.c.l.b16 %v1223
        %v1386 = vunpack.c.l.b16 %v1226
        %v1387 = vunpack.c.l.b16 %v1229
        %v1388 = vunpack.c.l.b16 %v1232
        %v1389 = vunpack.c.l.b16 %v1235
        %v1390 = vunpack.c.l.b16 %v1238
        %v1391 = vunpack.c.l.b16 %v1241
        %v1392 = vunpack.c.l.b16 %v1244
        %v1393 = vunpack.c.l.b16 %v1247
        %v1394 = vunpack.c.l.b16 %v1250
        %v1395 = vpack.c.b16 %v1377, %v1377
        %v1396 = vpack.c.b16 %v1378, %v1378
        %v1397 = vpack.c.b16 %v1379, %v1379
        %v1398 = vpack.c.b16 %v1380, %v1380
        %v1399 = vpack.c.b16 %v1381, %v1381
        %v1400 = vpack.c.b16 %v1382, %v1382
        %v1401 = vpack.c.b16 %v1383, %v1383
        %v1402 = vpack.c.b16 %v1384, %v1384
        %v1403 = vpack.c.b16 %v1385, %v1385
        %v1404 = vpack.c.b16 %v1386, %v1386
        %v1405 = vpack.c.b16 %v1387, %v1387
        %v1406 = vpack.c.b16 %v1388, %v1388
        %v1407 = vpack.c.b16 %v1389, %v1389
        %v1408 = vpack.c.b16 %v1390, %v1390
        %v1409 = vpack.c.b16 %v1391, %v1391
        %v1410 = vpack.c.b16 %v1392, %v1392
        %v1411 = vpack.c.b16 %v1393, %v1393
        %v1412 = vpack.c.b16 %v1394, %v1394
        %vm1413 = vsmask.f32 7424
        %v1415 = vshrl.u32 %v1323, 16
        %v1417 = vshll.u32 %v1323, 16
        %v1419 = vrot.slane %v1417, 1
        %v1420 = vor.u32 %v1415, %v1419
        %v1422 = vshll.u32 %v1395, 16
        %v1424 = vrot.slane %v1422, 1
        %v1425 = vsel %vm1413, %v1420, %v1424
        %v1427 = vshrl.u32 %v1324, 16
        %v1429 = vshll.u32 %v1324, 16
        %v1431 = vrot.slane %v1429, 1
        %v1432 = vor.u32 %v1427, %v1431
        %v1434 = vshll.u32 %v1396, 16
        %v1436 = vrot.slane %v1434, 1
        %v1437 = vsel %vm1413, %v1432, %v1436
        %v1439 = vshrl.u32 %v1325, 16
        %v1441 = vshll.u32 %v1325, 16
        %v1443 = vrot.slane %v1441, 1
        %v1444 = vor.u32 %v1439, %v1443
        %v1446 = vshll.u32 %v1397, 16
        %v1448 = vrot.slane %v1446, 1
        %v1449 = vsel %vm1413, %v1444, %v1448
        %v1451 = vshrl.u32 %v1326, 16
        %v1453 = vshll.u32 %v1326, 16
        %v1455 = vrot.slane %v1453, 1
        %v1456 = vor.u32 %v1451, %v1455
        %v1458 = vshll.u32 %v1398, 16
        %v1460 = vrot.slane %v1458, 1
        %v1461 = vsel %vm1413, %v1456, %v1460
        %v1463 = vshrl.u32 %v1327, 16
        %v1465 = vshll.u32 %v1327, 16
        %v1467 = vrot.slane %v1465, 1
        %v1468 = vor.u32 %v1463, %v1467
        %v1470 = vshll.u32 %v1399, 16
        %v1472 = vrot.slane %v1470, 1
        %v1473 = vsel %vm1413, %v1468, %v1472
        %v1475 = vshrl.u32 %v1328, 16
        %v1477 = vshll.u32 %v1328, 16
        %v1479 = vrot.slane %v1477, 1
        %v1480 = vor.u32 %v1475, %v1479
        %v1482 = vshll.u32 %v1400, 16
        %v1484 = vrot.slane %v1482, 1
        %v1485 = vsel %vm1413, %v1480, %v1484
        %v1487 = vshrl.u32 %v1329, 16
        %v1489 = vshll.u32 %v1329, 16
        %v1491 = vrot.slane %v1489, 1
        %v1492 = vor.u32 %v1487, %v1491
        %v1494 = vshll.u32 %v1401, 16
        %v1496 = vrot.slane %v1494, 1
        %v1497 = vsel %vm1413, %v1492, %v1496
        %v1499 = vshrl.u32 %v1330, 16
        %v1501 = vshll.u32 %v1330, 16
        %v1503 = vrot.slane %v1501, 1
        %v1504 = vor.u32 %v1499, %v1503
        %v1506 = vshll.u32 %v1402, 16
        %v1508 = vrot.slane %v1506, 1
        %v1509 = vsel %vm1413, %v1504, %v1508
        %v1511 = vshrl.u32 %v1331, 16
        %v1513 = vshll.u32 %v1331, 16
        %v1515 = vrot.slane %v1513, 1
        %v1516 = vor.u32 %v1511, %v1515
        %v1518 = vshll.u32 %v1403, 16
        %v1520 = vrot.slane %v1518, 1
        %v1521 = vsel %vm1413, %v1516, %v1520
        %v1523 = vshrl.u32 %v1332, 16
        %v1525 = vshll.u32 %v1332, 16
        %v1527 = vrot.slane %v1525, 1
        %v1528 = vor.u32 %v1523, %v1527
        %v1530 = vshll.u32 %v1404, 16
        %v1532 = vrot.slane %v1530, 1
        %v1533 = vsel %vm1413, %v1528, %v1532
        %v1535 = vshrl.u32 %v1333, 16
        %v1537 = vshll.u32 %v1333, 16
        %v1539 = vrot.slane %v1537, 1
        %v1540 = vor.u32 %v1535, %v1539
        %v1542 = vshll.u32 %v1405, 16
        %v1544 = vrot.slane %v1542, 1
        %v1545 = vsel %vm1413, %v1540, %v1544
        %v1547 = vshrl.u32 %v1334, 16
        %v1549 = vshll.u32 %v1334, 16
        %v1551 = vrot.slane %v1549, 1
        %v1552 = vor.u32 %v1547, %v1551
        %v1554 = vshll.u32 %v1406, 16
        %v1556 = vrot.slane %v1554, 1
        %v1557 = vsel %vm1413, %v1552, %v1556
        %v1559 = vshrl.u32 %v1335, 16
        %v1561 = vshll.u32 %v1335, 16
        %v1563 = vrot.slane %v1561, 1
        %v1564 = vor.u32 %v1559, %v1563
        %v1566 = vshll.u32 %v1407, 16
        %v1568 = vrot.slane %v1566, 1
        %v1569 = vsel %vm1413, %v1564, %v1568
        %v1571 = vshrl.u32 %v1336, 16
        %v1573 = vshll.u32 %v1336, 16
        %v1575 = vrot.slane %v1573, 1
        %v1576 = vor.u32 %v1571, %v1575
        %v1578 = vshll.u32 %v1408, 16
        %v1580 = vrot.slane %v1578, 1
        %v1581 = vsel %vm1413, %v1576, %v1580
        %v1583 = vshrl.u32 %v1337, 16
        %v1585 = vshll.u32 %v1337, 16
        %v1587 = vrot.slane %v1585, 1
        %v1588 = vor.u32 %v1583, %v1587
        %v1590 = vshll.u32 %v1409, 16
        %v1592 = vrot.slane %v1590, 1
        %v1593 = vsel %vm1413, %v1588, %v1592
        %v1595 = vshrl.u32 %v1338, 16
        %v1597 = vshll.u32 %v1338, 16
        %v1599 = vrot.slane %v1597, 1
        %v1600 = vor.u32 %v1595, %v1599
        %v1602 = vshll.u32 %v1410, 16
        %v1604 = vrot.slane %v1602, 1
        %v1605 = vsel %vm1413, %v1600, %v1604
        %v1607 = vshrl.u32 %v1339, 16
        %v1609 = vshll.u32 %v1339, 16
        %v1611 = vrot.slane %v1609, 1
        %v1612 = vor.u32 %v1607, %v1611
        %v1614 = vshll.u32 %v1411, 16
        %v1616 = vrot.slane %v1614, 1
        %v1617 = vsel %vm1413, %v1612, %v1616
        %v1619 = vshrl.u32 %v1340, 16
        %v1621 = vshll.u32 %v1340, 16
        %v1623 = vrot.slane %v1621, 1
        %v1624 = vor.u32 %v1619, %v1623
        %v1626 = vshll.u32 %v1412, 16
        %v1628 = vrot.slane %v1626, 1
        %v1629 = vsel %vm1413, %v1624, %v1628
        %vm1648 = vcmask 1046528
        %v1649 = vrot.slane %v1323, 1
        %v1650 = vrot.slane %v1395, 1
        %v1651 = vsel %vm1648, %v1649, %v1650
        %v1652 = vrot.slane %v1324, 1
        %v1653 = vrot.slane %v1396, 1
        %v1654 = vsel %vm1648, %v1652, %v1653
        %v1655 = vrot.slane %v1325, 1
        %v1656 = vrot.slane %v1397, 1
        %v1657 = vsel %vm1648, %v1655, %v1656
        %v1658 = vrot.slane %v1326, 1
        %v1659 = vrot.slane %v1398, 1
        %v1660 = vsel %vm1648, %v1658, %v1659
        %v1661 = vrot.slane %v1327, 1
        %v1662 = vrot.slane %v1399, 1
        %v1663 = vsel %vm1648, %v1661, %v1662
        %v1664 = vrot.slane %v1328, 1
        %v1665 = vrot.slane %v1400, 1
        %v1666 = vsel %vm1648, %v1664, %v1665
        %v1667 = vrot.slane %v1329, 1
        %v1668 = vrot.slane %v1401, 1
        %v1669 = vsel %vm1648, %v1667, %v1668
        %v1670 = vrot.slane %v1330, 1
        %v1671 = vrot.slane %v1402, 1
        %v1672 = vsel %vm1648, %v1670, %v1671
        %v1673 = vrot.slane %v1331, 1
        %v1674 = vrot.slane %v1403, 1
        %v1675 = vsel %vm1648, %v1673, %v1674
        %v1676 = vrot.slane %v1332, 1
        %v1677 = vrot.slane %v1404, 1
        %v1678 = vsel %vm1648, %v1676, %v1677
        %v1679 = vrot.slane %v1333, 1
        %v1680 = vrot.slane %v1405, 1
        %v1681 = vsel %vm1648, %v1679, %v1680
        %v1682 = vrot.slane %v1334, 1
        %v1683 = vrot.slane %v1406, 1
        %v1684 = vsel %vm1648, %v1682, %v1683
        %v1685 = vrot.slane %v1335, 1
        %v1686 = vrot.slane %v1407, 1
        %v1687 = vsel %vm1648, %v1685, %v1686
        %v1688 = vrot.slane %v1336, 1
        %v1689 = vrot.slane %v1408, 1
        %v1690 = vsel %vm1648, %v1688, %v1689
        %v1691 = vrot.slane %v1337, 1
        %v1692 = vrot.slane %v1409, 1
        %v1693 = vsel %vm1648, %v1691, %v1692
        %v1694 = vrot.slane %v1338, 1
        %v1695 = vrot.slane %v1410, 1
        %v1696 = vsel %vm1648, %v1694, %v1695
        %v1697 = vrot.slane %v1339, 1
        %v1698 = vrot.slane %v1411, 1
        %v1699 = vsel %vm1648, %v1697, %v1698
        %v1700 = vrot.slane %v1340, 1
        %v1701 = vrot.slane %v1412, 1
        %v1702 = vsel %vm1648, %v1700, %v1701
        %v1721 = vld [vmem:[%s3] sm:$0xf]
        %v1722 = vld [vmem:[%s3 + $0x4] sm:$0xf]
        %v1723 = vld [vmem:[%s3 + $0x8] sm:$0xf]
        %v1724 = vld [vmem:[%s3 + $0xc] sm:$0xf]
        %v1725 = vld [vmem:[%s3 + $0x10] sm:$0xf]
        %v1726 = vld [vmem:[%s3 + $0x14] sm:$0xf]
        %v1727 = vld [vmem:[%s3 + $0x18] sm:$0xf]
        %v1728 = vld [vmem:[%s3 + $0x1c] sm:$0xf]
        %v1729 = vld [vmem:[%s3 + $0x20] sm:$0xf]
        %v1730 = vld [vmem:[%s3 + $0x24] sm:$0xf]
        %v1731 = vld [vmem:[%s3 + $0x28] sm:$0xf]
        %v1732 = vld [vmem:[%s3 + $0x2c] sm:$0xf]
        %v1733 = vld [vmem:[%s3 + $0x30] sm:$0xf]
        %v1734 = vld [vmem:[%s3 + $0x34] sm:$0xf]
        %v1735 = vld [vmem:[%s3 + $0x38] sm:$0xf]
        %v1736 = vld [vmem:[%s3 + $0x3c] sm:$0xf]
        %v1737 = vld [vmem:[%s3 + $0x40] sm:$0xf]
        %v1738 = vld [vmem:[%s3 + $0x44] sm:$0xf]
        %v1739 = vld [vmem:[%s3 + $0x48] sm:$0xf]
        %v1740 = vld [vmem:[%s3 + $0x4c] sm:$0xf]
        %v1741 = vld [vmem:[%s3 + $0x50] sm:$0xf]
        %v1742 = vld [vmem:[%s3 + $0x54] sm:$0xf]
        %v1743 = vld [vmem:[%s3 + $0x58] sm:$0xf]
        %v1744 = vld [vmem:[%s3 + $0x5c] sm:$0xf]
        %v1745 = vld [vmem:[%s3 + $0x60] sm:$0xf]
        %v1746 = vld [vmem:[%s3 + $0x64] sm:$0xf]
        %v1747 = vld [vmem:[%s3 + $0x68] sm:$0xf]
        %v1748 = vld [vmem:[%s3 + $0x6c] sm:$0xf]
        %v1749 = vld [vmem:[%s3 + $0x70] sm:$0xf]
        %v1750 = vld [vmem:[%s3 + $0x74] sm:$0xf]
        %v1751 = vld [vmem:[%s3 + $0x78] sm:$0xf]
        %v1752 = vld [vmem:[%s3 + $0x7c] sm:$0xf]
        %v1753 = vld [vmem:[%s3 + $0x80] sm:$0xf]
        %v1754 = vld [vmem:[%s3 + $0x84] sm:$0xf]
        %v1755 = vld [vmem:[%s3 + $0x88] sm:$0xf]
        %v1756 = vld [vmem:[%s3 + $0x8c] sm:$0xf]
        %v1757 = vld [vmem:[%s3 + $0x90] sm:$0xf]
        %v1758 = vld [vmem:[%s3 + $0x94] sm:$0xf]
        %v1759 = vld [vmem:[%s3 + $0x98] sm:$0xf]
        %v1760 = vld [vmem:[%s3 + $0x9c] sm:$0xf]
        %v1761 = vld [vmem:[%s3 + $0xa0] sm:$0xf]
        %v1762 = vld [vmem:[%s3 + $0xa4] sm:$0xf]
        %v1763 = vld [vmem:[%s3 + $0xa8] sm:$0xf]
        %v1764 = vld [vmem:[%s3 + $0xac] sm:$0xf]
        %v1765 = vld [vmem:[%s3 + $0xb0] sm:$0xf]
        %v1766 = vld [vmem:[%s3 + $0xb4] sm:$0xf]
        %v1767 = vld [vmem:[%s3 + $0xb8] sm:$0xf]
        %v1768 = vld [vmem:[%s3 + $0xbc] sm:$0xf]
        %v1817 = vunpack.c.l.b16 %v1721
        %v1818 = vunpack.c.l.b16 %v1722
        %v1819 = vunpack.c.l.b16 %v1723
        %v1820 = vunpack.c.l.b16 %v1724
        %v1821 = vunpack.c.l.b16 %v1725
        %v1822 = vunpack.c.l.b16 %v1726
        %v1823 = vunpack.c.l.b16 %v1727
        %v1824 = vunpack.c.l.b16 %v1728
        %v1825 = vunpack.c.l.b16 %v1729
        %v1826 = vunpack.c.l.b16 %v1730
        %v1827 = vunpack.c.l.b16 %v1731
        %v1828 = vunpack.c.l.b16 %v1732
        %v1829 = vunpack.c.l.b16 %v1733
        %v1830 = vunpack.c.l.b16 %v1734
        %v1831 = vunpack.c.l.b16 %v1735
        %v1832 = vunpack.c.l.b16 %v1736
        %v1833 = vunpack.c.l.b16 %v1737
        %v1834 = vunpack.c.l.b16 %v1738
        %v1835 = vunpack.c.l.b16 %v1739
        %v1836 = vunpack.c.l.b16 %v1740
        %v1837 = vunpack.c.l.b16 %v1741
        %v1838 = vunpack.c.l.b16 %v1742
        %v1839 = vunpack.c.l.b16 %v1743
        %v1840 = vunpack.c.l.b16 %v1744
        %v1841 = vunpack.c.l.b16 %v1745
        %v1842 = vunpack.c.l.b16 %v1746
        %v1843 = vunpack.c.l.b16 %v1747
        %v1844 = vunpack.c.l.b16 %v1748
        %v1845 = vunpack.c.l.b16 %v1749
        %v1846 = vunpack.c.l.b16 %v1750
        %v1847 = vunpack.c.l.b16 %v1751
        %v1848 = vunpack.c.l.b16 %v1752
        %v1849 = vunpack.c.l.b16 %v1753
        %v1850 = vunpack.c.l.b16 %v1754
        %v1851 = vunpack.c.l.b16 %v1755
        %v1852 = vunpack.c.l.b16 %v1756
        %v1853 = vunpack.c.l.b16 %v1757
        %v1854 = vunpack.c.l.b16 %v1758
        %v1855 = vunpack.c.l.b16 %v1759
        %v1856 = vunpack.c.l.b16 %v1760
        %v1857 = vunpack.c.l.b16 %v1761
        %v1858 = vunpack.c.l.b16 %v1762
        %v1859 = vunpack.c.l.b16 %v1763
        %v1860 = vunpack.c.l.b16 %v1764
        %v1861 = vunpack.c.l.b16 %v1765
        %v1862 = vunpack.c.l.b16 %v1766
        %v1863 = vunpack.c.l.b16 %v1767
        %v1864 = vunpack.c.l.b16 %v1768
        %v1865 = vpack.c.b16 %v1818, %v1817
        %v1866 = vpack.c.b16 %v1820, %v1819
        %v1867 = vpack.c.b16 %v1822, %v1821
        %v1868 = vpack.c.b16 %v1824, %v1823
        %v1869 = vpack.c.b16 %v1826, %v1825
        %v1870 = vpack.c.b16 %v1828, %v1827
        %v1871 = vpack.c.b16 %v1830, %v1829
        %v1872 = vpack.c.b16 %v1832, %v1831
        %v1873 = vpack.c.b16 %v1834, %v1833
        %v1874 = vpack.c.b16 %v1836, %v1835
        %v1875 = vpack.c.b16 %v1838, %v1837
        %v1876 = vpack.c.b16 %v1840, %v1839
        %v1877 = vpack.c.b16 %v1842, %v1841
        %v1878 = vpack.c.b16 %v1844, %v1843
        %v1879 = vpack.c.b16 %v1846, %v1845
        %v1880 = vpack.c.b16 %v1848, %v1847
        %v1881 = vpack.c.b16 %v1850, %v1849
        %v1882 = vpack.c.b16 %v1852, %v1851
        %v1883 = vpack.c.b16 %v1854, %v1853
        %v1884 = vpack.c.b16 %v1856, %v1855
        %v1885 = vpack.c.b16 %v1858, %v1857
        %v1886 = vpack.c.b16 %v1860, %v1859
        %v1887 = vpack.c.b16 %v1862, %v1861
        %v1888 = vpack.c.b16 %v1864, %v1863
        %1913 = vmatprep.subr.bf16.mxu0 0
        %1914 = vmatpush1.bf16.msra.mxu0 %v1872
        %1915 = vmatprep.subr.bf16.mxu0 0
        %1916 = vmatpush1.bf16.msra.mxu0 %v1871
        %1917 = vmatprep.subr.bf16.mxu0 0
        %1918 = vmatpush1.bf16.msra.mxu0 %v1870
        %1919 = vmatprep.subr.bf16.mxu0 0
        %1920 = vmatpush1.bf16.msra.mxu0 %v1869
        %1921 = vmatprep.subr.bf16.mxu0 0
        %1922 = vmatpush1.bf16.msra.mxu0 %v1868
        %1923 = vmatprep.subr.bf16.mxu0 0
        %1924 = vmatpush1.bf16.msra.mxu0 %v1867
        %1925 = vmatprep.subr.bf16.mxu0 0
        %1926 = vmatpush1.bf16.msra.mxu0 %v1866
        %1927 = vmatprep.subr.bf16.mxu0 0
        %1928 = vmatpush1.bf16.msra.mxu0 %v1865
        %1929 = vmatprep.subr.bf16.mxu0 0
        %1930 = vmatpush2.bf16.msra.mxu0 %v1880
        %1931 = vmatprep.subr.bf16.mxu0 0
        %1932 = vmatpush2.bf16.msra.mxu0 %v1879
        %1933 = vmatprep.subr.bf16.mxu0 0
        %1934 = vmatpush2.bf16.msra.mxu0 %v1878
        %1935 = vmatprep.subr.bf16.mxu0 0
        %1936 = vmatpush2.bf16.msra.mxu0 %v1877
        %1937 = vmatprep.subr.bf16.mxu0 0
        %1938 = vmatpush2.bf16.msra.mxu0 %v1876
        %1939 = vmatprep.subr.bf16.mxu0 0
        %1940 = vmatpush2.bf16.msra.mxu0 %v1875
        %1941 = vmatprep.subr.bf16.mxu0 0
        %1942 = vmatpush2.bf16.msra.mxu0 %v1874
        %1943 = vmatprep.subr.bf16.mxu0 0
        %1944 = vmatpush2.bf16.msra.mxu0 %v1873
        %1945 = vmatprep.mubr.bf16.mxu0 %v1425
        %1946 = vmatmul.mubr.bf16.gmra.mxu0 %v1323
        %v1947 = vpop.f32.mrf.mxu0
        %v1948 = vadd.f32 0.0, %v1947
        %v1949 = vpop.f32.mrf.mxu0
        %v1950 = vpop.f32.mrf.mxu0
        %v1951 = vadd.f32 0.0, %v1950
        %v1952 = vpop.f32.mrf.mxu0
        %1953 = vmatprep.mubr.bf16.mxu0 %v1437
        %1954 = vmatmul.mubr.bf16.gmra.mxu0 %v1324
        %v1955 = vpop.f32.mrf.mxu0
        %v1956 = vadd.f32 0.0, %v1955
        %v1957 = vpop.f32.mrf.mxu0
        %v1958 = vpop.f32.mrf.mxu0
        %v1959 = vadd.f32 0.0, %v1958
        %v1960 = vpop.f32.mrf.mxu0
        %1961 = vmatprep.mubr.bf16.mxu0 %v1449
        %1962 = vmatmul.mubr.bf16.gmra.mxu0 %v1325
        %v1963 = vpop.f32.mrf.mxu0
        %v1964 = vadd.f32 0.0, %v1963
        %v1965 = vpop.f32.mrf.mxu0
        %v1966 = vpop.f32.mrf.mxu0
        %v1967 = vadd.f32 0.0, %v1966
        %v1968 = vpop.f32.mrf.mxu0
        %1969 = vmatprep.mubr.bf16.mxu0 %v1461
        %1970 = vmatmul.mubr.bf16.gmra.mxu0 %v1326
        %v1971 = vpop.f32.mrf.mxu0
        %v1972 = vadd.f32 0.0, %v1971
        %v1973 = vpop.f32.mrf.mxu0
        %v1974 = vpop.f32.mrf.mxu0
        %v1975 = vadd.f32 0.0, %v1974
        %v1976 = vpop.f32.mrf.mxu0
        %1977 = vmatprep.mubr.bf16.mxu0 %v1473
        %1978 = vmatmul.mubr.bf16.gmra.mxu0 %v1327
        %v1979 = vpop.f32.mrf.mxu0
        %v1980 = vadd.f32 0.0, %v1979
        %v1981 = vpop.f32.mrf.mxu0
        %v1982 = vpop.f32.mrf.mxu0
        %v1983 = vadd.f32 0.0, %v1982
        %v1984 = vpop.f32.mrf.mxu0
        %1985 = vmatprep.mubr.bf16.mxu0 %v1485
        %1986 = vmatmul.mubr.bf16.gmra.mxu0 %v1328
        %v1987 = vpop.f32.mrf.mxu0
        %v1988 = vadd.f32 0.0, %v1987
        %v1989 = vpop.f32.mrf.mxu0
        %v1990 = vpop.f32.mrf.mxu0
        %v1991 = vadd.f32 0.0, %v1990
        %v1992 = vpop.f32.mrf.mxu0
        %1993 = vmatprep.mubr.bf16.mxu0 %v1497
        %1994 = vmatmul.mubr.bf16.gmra.mxu0 %v1329
        %v1995 = vpop.f32.mrf.mxu0
        %v1996 = vadd.f32 0.0, %v1995
        %v1997 = vpop.f32.mrf.mxu0
        %v1998 = vpop.f32.mrf.mxu0
        %v1999 = vadd.f32 0.0, %v1998
        %v2000 = vpop.f32.mrf.mxu0
        %2001 = vmatprep.mubr.bf16.mxu0 %v1509
        %2002 = vmatmul.mubr.bf16.gmra.mxu0 %v1330
        %v2003 = vpop.f32.mrf.mxu0
        %v2004 = vadd.f32 0.0, %v2003
        %v2005 = vpop.f32.mrf.mxu0
        %v2006 = vpop.f32.mrf.mxu0
        %v2007 = vadd.f32 0.0, %v2006
        %v2008 = vpop.f32.mrf.mxu0
        %2009 = vmatprep.mubr.bf16.mxu0 %v1521
        %2010 = vmatmul.mubr.bf16.gmra.mxu0 %v1331
        %v2011 = vpop.f32.mrf.mxu0
        %v2012 = vadd.f32 0.0, %v2011
        %v2013 = vpop.f32.mrf.mxu0
        %v2014 = vpop.f32.mrf.mxu0
        %v2015 = vadd.f32 0.0, %v2014
        %v2016 = vpop.f32.mrf.mxu0
        %2017 = vmatprep.mubr.bf16.mxu0 %v1533
        %2018 = vmatmul.mubr.bf16.gmra.mxu0 %v1332
        %v2019 = vpop.f32.mrf.mxu0
        %v2020 = vadd.f32 0.0, %v2019
        %v2021 = vpop.f32.mrf.mxu0
        %v2022 = vpop.f32.mrf.mxu0
        %v2023 = vadd.f32 0.0, %v2022
        %v2024 = vpop.f32.mrf.mxu0
        %2025 = vmatprep.mubr.bf16.mxu0 %v1545
        %2026 = vmatmul.mubr.bf16.gmra.mxu0 %v1333
        %v2027 = vpop.f32.mrf.mxu0
        %v2028 = vadd.f32 0.0, %v2027
        %v2029 = vpop.f32.mrf.mxu0
        %v2030 = vpop.f32.mrf.mxu0
        %v2031 = vadd.f32 0.0, %v2030
        %v2032 = vpop.f32.mrf.mxu0
        %2033 = vmatprep.mubr.bf16.mxu0 %v1557
        %2034 = vmatmul.mubr.bf16.gmra.mxu0 %v1334
        %v2035 = vpop.f32.mrf.mxu0
        %v2036 = vadd.f32 0.0, %v2035
        %v2037 = vpop.f32.mrf.mxu0
        %v2038 = vpop.f32.mrf.mxu0
        %v2039 = vadd.f32 0.0, %v2038
        %v2040 = vpop.f32.mrf.mxu0
        %2041 = vmatprep.mubr.bf16.mxu0 %v1569
        %2042 = vmatmul.mubr.bf16.gmra.mxu0 %v1335
        %v2043 = vpop.f32.mrf.mxu0
        %v2044 = vadd.f32 0.0, %v2043
        %v2045 = vpop.f32.mrf.mxu0
        %v2046 = vpop.f32.mrf.mxu0
        %v2047 = vadd.f32 0.0, %v2046
        %v2048 = vpop.f32.mrf.mxu0
        %2049 = vmatprep.mubr.bf16.mxu0 %v1581
        %2050 = vmatmul.mubr.bf16.gmra.mxu0 %v1336
        %v2051 = vpop.f32.mrf.mxu0
        %v2052 = vadd.f32 0.0, %v2051
        %v2053 = vpop.f32.mrf.mxu0
        %v2054 = vpop.f32.mrf.mxu0
        %v2055 = vadd.f32 0.0, %v2054
        %v2056 = vpop.f32.mrf.mxu0
        %2057 = vmatprep.mubr.bf16.mxu0 %v1593
        %2058 = vmatmul.mubr.bf16.gmra.mxu0 %v1337
        %v2059 = vpop.f32.mrf.mxu0
        %v2060 = vadd.f32 0.0, %v2059
        %v2061 = vpop.f32.mrf.mxu0
        %v2062 = vpop.f32.mrf.mxu0
        %v2063 = vadd.f32 0.0, %v2062
        %v2064 = vpop.f32.mrf.mxu0
        %2065 = vmatprep.mubr.bf16.mxu0 %v1605
        %2066 = vmatmul.mubr.bf16.gmra.mxu0 %v1338
        %v2067 = vpop.f32.mrf.mxu0
        %v2068 = vadd.f32 0.0, %v2067
        %v2069 = vpop.f32.mrf.mxu0
        %v2070 = vpop.f32.mrf.mxu0
        %v2071 = vadd.f32 0.0, %v2070
        %v2072 = vpop.f32.mrf.mxu0
        %2073 = vmatprep.mubr.bf16.mxu0 %v1617
        %2074 = vmatmul.mubr.bf16.gmra.mxu0 %v1339
        %v2075 = vpop.f32.mrf.mxu0
        %v2076 = vadd.f32 0.0, %v2075
        %v2077 = vpop.f32.mrf.mxu0
        %v2078 = vpop.f32.mrf.mxu0
        %v2079 = vadd.f32 0.0, %v2078
        %v2080 = vpop.f32.mrf.mxu0
        %2081 = vmatprep.mubr.bf16.mxu0 %v1629
        %2082 = vmatmul.mubr.bf16.gmra.mxu0 %v1340
        %v2083 = vpop.f32.mrf.mxu0
        %v2084 = vadd.f32 0.0, %v2083
        %v2085 = vpop.f32.mrf.mxu0
        %v2086 = vpop.f32.mrf.mxu0
        %v2087 = vadd.f32 0.0, %v2086
        %v2088 = vpop.f32.mrf.mxu0
        %2089 = vdwg.mxu0
        %2090 = vmatprep.subr.bf16.mxu0 0
        %2091 = vmatpush1.bf16.msra.mxu0 %v1888
        %2092 = vmatprep.subr.bf16.mxu0 0
        %2093 = vmatpush1.bf16.msra.mxu0 %v1887
        %2094 = vmatprep.subr.bf16.mxu0 0
        %2095 = vmatpush1.bf16.msra.mxu0 %v1886
        %2096 = vmatprep.subr.bf16.mxu0 0
        %2097 = vmatpush1.bf16.msra.mxu0 %v1885
        %2098 = vmatprep.subr.bf16.mxu0 0
        %2099 = vmatpush1.bf16.msra.mxu0 %v1884
        %2100 = vmatprep.subr.bf16.mxu0 0
        %2101 = vmatpush1.bf16.msra.mxu0 %v1883
        %2102 = vmatprep.subr.bf16.mxu0 0
        %2103 = vmatpush1.bf16.msra.mxu0 %v1882
        %2104 = vmatprep.subr.bf16.mxu0 0
        %2105 = vmatpush1.bf16.msra.mxu0 %v1881
        %2106 = vmatprep.subr.bf16.mxu0 0
        %2107 = vmatpush2.bf16.msra.mxu0 0
        %2108 = vmatprep.subr.bf16.mxu0 0
        %2109 = vmatpush2.bf16.msra.mxu0 0
        %2110 = vmatprep.subr.bf16.mxu0 0
        %2111 = vmatpush2.bf16.msra.mxu0 0
        %2112 = vmatprep.subr.bf16.mxu0 0
        %2113 = vmatpush2.bf16.msra.mxu0 0
        %2114 = vmatprep.subr.bf16.mxu0 0
        %2115 = vmatpush2.bf16.msra.mxu0 0
        %2116 = vmatprep.subr.bf16.mxu0 0
        %2117 = vmatpush2.bf16.msra.mxu0 0
        %2118 = vmatprep.subr.bf16.mxu0 0
        %2119 = vmatpush2.bf16.msra.mxu0 0
        %2120 = vmatprep.subr.bf16.mxu0 0
        %2121 = vmatpush2.bf16.msra.mxu0 0
        %2122 = vmatprep.mubr.bf16.mxu0 0
        %2123 = vmatmul.mubr.bf16.gmra.mxu0 %v1651
        %v2124 = vpop.f32.mrf.mxu0
        %v2125 = vadd.f32 %v1948, %v2124
        %v2126 = vpop.f32.mrf.mxu0
        %v2127 = vpop.f32.mrf.mxu0
        %v2128 = vadd.f32 %v1951, %v2127
        %v2129 = vpop.f32.mrf.mxu0
        %2130 = vmatprep.mubr.bf16.mxu0 0
        %2131 = vmatmul.mubr.bf16.gmra.mxu0 %v1654
        %v2132 = vpop.f32.mrf.mxu0
        %v2133 = vadd.f32 %v1956, %v2132
        %v2134 = vpop.f32.mrf.mxu0
        %v2135 = vpop.f32.mrf.mxu0
        %v2136 = vadd.f32 %v1959, %v2135
        %v2137 = vpop.f32.mrf.mxu0
        %2138 = vmatprep.mubr.bf16.mxu0 0
        %2139 = vmatmul.mubr.bf16.gmra.mxu0 %v1657
        %v2140 = vpop.f32.mrf.mxu0
        %v2141 = vadd.f32 %v1964, %v2140
        %v2142 = vpop.f32.mrf.mxu0
        %v2143 = vpop.f32.mrf.mxu0
        %v2144 = vadd.f32 %v1967, %v2143
        %v2145 = vpop.f32.mrf.mxu0
        %2146 = vmatprep.mubr.bf16.mxu0 0
        %2147 = vmatmul.mubr.bf16.gmra.mxu0 %v1660
        %v2148 = vpop.f32.mrf.mxu0
        %v2149 = vadd.f32 %v1972, %v2148
        %v2150 = vpop.f32.mrf.mxu0
        %v2151 = vpop.f32.mrf.mxu0
        %v2152 = vadd.f32 %v1975, %v2151
        %v2153 = vpop.f32.mrf.mxu0
        %2154 = vmatprep.mubr.bf16.mxu0 0
        %2155 = vmatmul.mubr.bf16.gmra.mxu0 %v1663
        %v2156 = vpop.f32.mrf.mxu0
        %v2157 = vadd.f32 %v1980, %v2156
        %v2158 = vpop.f32.mrf.mxu0
        %v2159 = vpop.f32.mrf.mxu0
        %v2160 = vadd.f32 %v1983, %v2159
        %v2161 = vpop.f32.mrf.mxu0
        %2162 = vmatprep.mubr.bf16.mxu0 0
        %2163 = vmatmul.mubr.bf16.gmra.mxu0 %v1666
        %v2164 = vpop.f32.mrf.mxu0
        %v2165 = vadd.f32 %v1988, %v2164
        %v2166 = vpop.f32.mrf.mxu0
        %v2167 = vpop.f32.mrf.mxu0
        %v2168 = vadd.f32 %v1991, %v2167
        %v2169 = vpop.f32.mrf.mxu0
        %2170 = vmatprep.mubr.bf16.mxu0 0
        %2171 = vmatmul.mubr.bf16.gmra.mxu0 %v1669
        %v2172 = vpop.f32.mrf.mxu0
        %v2173 = vadd.f32 %v1996, %v2172
        %v2174 = vpop.f32.mrf.mxu0
        %v2175 = vpop.f32.mrf.mxu0
        %v2176 = vadd.f32 %v1999, %v2175
        %v2177 = vpop.f32.mrf.mxu0
        %2178 = vmatprep.mubr.bf16.mxu0 0
        %2179 = vmatmul.mubr.bf16.gmra.mxu0 %v1672
        %v2180 = vpop.f32.mrf.mxu0
        %v2181 = vadd.f32 %v2004, %v2180
        %v2182 = vpop.f32.mrf.mxu0
        %v2183 = vpop.f32.mrf.mxu0
        %v2184 = vadd.f32 %v2007, %v2183
        %v2185 = vpop.f32.mrf.mxu0
        %2186 = vmatprep.mubr.bf16.mxu0 0
        %2187 = vmatmul.mubr.bf16.gmra.mxu0 %v1675
        %v2188 = vpop.f32.mrf.mxu0
        %v2189 = vadd.f32 %v2012, %v2188
        %v2190 = vpop.f32.mrf.mxu0
        %v2191 = vpop.f32.mrf.mxu0
        %v2192 = vadd.f32 %v2015, %v2191
        %v2193 = vpop.f32.mrf.mxu0
        %2194 = vmatprep.mubr.bf16.mxu0 0
        %2195 = vmatmul.mubr.bf16.gmra.mxu0 %v1678
        %v2196 = vpop.f32.mrf.mxu0
        %v2197 = vadd.f32 %v2020, %v2196
        %v2198 = vpop.f32.mrf.mxu0
        %v2199 = vpop.f32.mrf.mxu0
        %v2200 = vadd.f32 %v2023, %v2199
        %v2201 = vpop.f32.mrf.mxu0
        %2202 = vmatprep.mubr.bf16.mxu0 0
        %2203 = vmatmul.mubr.bf16.gmra.mxu0 %v1681
        %v2204 = vpop.f32.mrf.mxu0
        %v2205 = vadd.f32 %v2028, %v2204
        %v2206 = vpop.f32.mrf.mxu0
        %v2207 = vpop.f32.mrf.mxu0
        %v2208 = vadd.f32 %v2031, %v2207
        %v2209 = vpop.f32.mrf.mxu0
        %2210 = vmatprep.mubr.bf16.mxu0 0
        %2211 = vmatmul.mubr.bf16.gmra.mxu0 %v1684
        %v2212 = vpop.f32.mrf.mxu0
        %v2213 = vadd.f32 %v2036, %v2212
        %v2214 = vpop.f32.mrf.mxu0
        %v2215 = vpop.f32.mrf.mxu0
        %v2216 = vadd.f32 %v2039, %v2215
        %v2217 = vpop.f32.mrf.mxu0
        %2218 = vmatprep.mubr.bf16.mxu0 0
        %2219 = vmatmul.mubr.bf16.gmra.mxu0 %v1687
        %v2220 = vpop.f32.mrf.mxu0
        %v2221 = vadd.f32 %v2044, %v2220
        %v2222 = vpop.f32.mrf.mxu0
        %v2223 = vpop.f32.mrf.mxu0
        %v2224 = vadd.f32 %v2047, %v2223
        %v2225 = vpop.f32.mrf.mxu0
        %2226 = vmatprep.mubr.bf16.mxu0 0
        %2227 = vmatmul.mubr.bf16.gmra.mxu0 %v1690
        %v2228 = vpop.f32.mrf.mxu0
        %v2229 = vadd.f32 %v2052, %v2228
        %v2230 = vpop.f32.mrf.mxu0
        %v2231 = vpop.f32.mrf.mxu0
        %v2232 = vadd.f32 %v2055, %v2231
        %v2233 = vpop.f32.mrf.mxu0
        %2234 = vmatprep.mubr.bf16.mxu0 0
        %2235 = vmatmul.mubr.bf16.gmra.mxu0 %v1693
        %v2236 = vpop.f32.mrf.mxu0
        %v2237 = vadd.f32 %v2060, %v2236
        %v2238 = vpop.f32.mrf.mxu0
        %v2239 = vpop.f32.mrf.mxu0
        %v2240 = vadd.f32 %v2063, %v2239
        %v2241 = vpop.f32.mrf.mxu0
        %2242 = vmatprep.mubr.bf16.mxu0 0
        %2243 = vmatmul.mubr.bf16.gmra.mxu0 %v1696
        %v2244 = vpop.f32.mrf.mxu0
        %v2245 = vadd.f32 %v2068, %v2244
        %v2246 = vpop.f32.mrf.mxu0
        %v2247 = vpop.f32.mrf.mxu0
        %v2248 = vadd.f32 %v2071, %v2247
        %v2249 = vpop.f32.mrf.mxu0
        %2250 = vmatprep.mubr.bf16.mxu0 0
        %2251 = vmatmul.mubr.bf16.gmra.mxu0 %v1699
        %v2252 = vpop.f32.mrf.mxu0
        %v2253 = vadd.f32 %v2076, %v2252
        %v2254 = vpop.f32.mrf.mxu0
        %v2255 = vpop.f32.mrf.mxu0
        %v2256 = vadd.f32 %v2079, %v2255
        %v2257 = vpop.f32.mrf.mxu0
        %2258 = vmatprep.mubr.bf16.mxu0 0
        %2259 = vmatmul.mubr.bf16.gmra.mxu0 %v1702
        %v2260 = vpop.f32.mrf.mxu0
        %v2261 = vadd.f32 %v2084, %v2260
        %v2262 = vpop.f32.mrf.mxu0
        %v2263 = vpop.f32.mrf.mxu0
        %v2264 = vadd.f32 %v2087, %v2263
        %v2265 = vpop.f32.mrf.mxu0
        %2266 = vdwg.mxu0
        %2299 = vrot.lane.b32.xlu0 %v2133, 96
        %v2300 = vpop.permute.xlu0 %2299
        %2301 = vrot.lane.b32.xlu0 %v2136, 96
        %v2302 = vpop.permute.xlu0 %2301
        %2303 = vrot.lane.b32.xlu0 %v2141, 96
        %v2304 = vpop.permute.xlu0 %2303
        %2305 = vrot.lane.b32.xlu0 %v2144, 96
        %v2306 = vpop.permute.xlu0 %2305
        %2307 = vrot.lane.b32.xlu0 %v2149, 96
        %v2308 = vpop.permute.xlu0 %2307
        %2309 = vrot.lane.b32.xlu0 %v2152, 96
        %v2310 = vpop.permute.xlu0 %2309
        %2311 = vrot.lane.b32.xlu0 %v2157, 96
        %v2312 = vpop.permute.xlu0 %2311
        %2313 = vrot.lane.b32.xlu0 %v2160, 96
        %v2314 = vpop.permute.xlu0 %2313
        %2315 = vrot.lane.b32.xlu0 %v2165, 96
        %v2316 = vpop.permute.xlu0 %2315
        %2317 = vrot.lane.b32.xlu0 %v2168, 96
        %v2318 = vpop.permute.xlu0 %2317
        %2319 = vrot.lane.b32.xlu0 %v2173, 96
        %v2320 = vpop.permute.xlu0 %2319
        %2321 = vrot.lane.b32.xlu0 %v2176, 96
        %v2322 = vpop.permute.xlu0 %2321
        %2323 = vrot.lane.b32.xlu0 %v2181, 96
        %v2324 = vpop.permute.xlu0 %2323
        %2325 = vrot.lane.b32.xlu0 %v2184, 96
        %v2326 = vpop.permute.xlu0 %2325
        %2327 = vrot.lane.b32.xlu0 %v2189, 96
        %v2328 = vpop.permute.xlu0 %2327
        %2329 = vrot.lane.b32.xlu0 %v2192, 96
        %v2330 = vpop.permute.xlu0 %2329
        %2331 = vrot.lane.b32.xlu0 %v2197, 96
        %v2332 = vpop.permute.xlu0 %2331
        %2333 = vrot.lane.b32.xlu0 %v2200, 96
        %v2334 = vpop.permute.xlu0 %2333
        %2335 = vrot.lane.b32.xlu0 %v2205, 96
        %v2336 = vpop.permute.xlu0 %2335
        %2337 = vrot.lane.b32.xlu0 %v2208, 96
        %v2338 = vpop.permute.xlu0 %2337
        %2339 = vrot.lane.b32.xlu0 %v2213, 96
        %v2340 = vpop.permute.xlu0 %2339
        %2341 = vrot.lane.b32.xlu0 %v2216, 96
        %v2342 = vpop.permute.xlu0 %2341
        %2343 = vrot.lane.b32.xlu0 %v2221, 96
        %v2344 = vpop.permute.xlu0 %2343
        %2345 = vrot.lane.b32.xlu0 %v2224, 96
        %v2346 = vpop.permute.xlu0 %2345
        %2347 = vrot.lane.b32.xlu0 %v2229, 96
        %v2348 = vpop.permute.xlu0 %2347
        %2349 = vrot.lane.b32.xlu0 %v2232, 96
        %v2350 = vpop.permute.xlu0 %2349
        %2351 = vrot.lane.b32.xlu0 %v2237, 96
        %v2352 = vpop.permute.xlu0 %2351
        %2353 = vrot.lane.b32.xlu0 %v2240, 96
        %v2354 = vpop.permute.xlu0 %2353
        %2355 = vrot.lane.b32.xlu0 %v2245, 96
        %v2356 = vpop.permute.xlu0 %2355
        %2357 = vrot.lane.b32.xlu0 %v2248, 96
        %v2358 = vpop.permute.xlu0 %2357
        %2359 = vrot.lane.b32.xlu0 %v2253, 96
        %v2360 = vpop.permute.xlu0 %2359
        %2361 = vrot.lane.b32.xlu0 %v2256, 96
        %v2362 = vpop.permute.xlu0 %2361
        %v2395 = vadd.f32 %v2125, %v2300
        %v2396 = vadd.f32 %v2128, %v2302
        %v2397 = vadd.f32 %v2133, %v2304
        %v2398 = vadd.f32 %v2136, %v2306
        %v2399 = vadd.f32 %v2141, %v2308
        %v2400 = vadd.f32 %v2144, %v2310
        %v2401 = vadd.f32 %v2149, %v2312
        %v2402 = vadd.f32 %v2152, %v2314
        %v2403 = vadd.f32 %v2157, %v2316
        %v2404 = vadd.f32 %v2160, %v2318
        %v2405 = vadd.f32 %v2165, %v2320
        %v2406 = vadd.f32 %v2168, %v2322
        %v2407 = vadd.f32 %v2173, %v2324
        %v2408 = vadd.f32 %v2176, %v2326
        %v2409 = vadd.f32 %v2181, %v2328
        %v2410 = vadd.f32 %v2184, %v2330
        %v2411 = vadd.f32 %v2189, %v2332
        %v2412 = vadd.f32 %v2192, %v2334
        %v2413 = vadd.f32 %v2197, %v2336
        %v2414 = vadd.f32 %v2200, %v2338
        %v2415 = vadd.f32 %v2205, %v2340
        %v2416 = vadd.f32 %v2208, %v2342
        %v2417 = vadd.f32 %v2213, %v2344
        %v2418 = vadd.f32 %v2216, %v2346
        %v2419 = vadd.f32 %v2221, %v2348
        %v2420 = vadd.f32 %v2224, %v2350
        %v2421 = vadd.f32 %v2229, %v2352
        %v2422 = vadd.f32 %v2232, %v2354
        %v2423 = vadd.f32 %v2237, %v2356
        %v2424 = vadd.f32 %v2240, %v2358
        %v2425 = vadd.f32 %v2245, %v2360
        %v2426 = vadd.f32 %v2248, %v2362
        %2429 = vrot.lane.b32.xlu0 %v2141, 64
        %v2430 = vpop.permute.xlu0 %2429
        %2431 = vrot.lane.b32.xlu0 %v2144, 64
        %v2432 = vpop.permute.xlu0 %2431
        %2433 = vrot.lane.b32.xlu0 %v2149, 64
        %v2434 = vpop.permute.xlu0 %2433
        %2435 = vrot.lane.b32.xlu0 %v2152, 64
        %v2436 = vpop.permute.xlu0 %2435
        %2437 = vrot.lane.b32.xlu0 %v2157, 64
        %v2438 = vpop.permute.xlu0 %2437
        %2439 = vrot.lane.b32.xlu0 %v2160, 64
        %v2440 = vpop.permute.xlu0 %2439
        %2441 = vrot.lane.b32.xlu0 %v2165, 64
        %v2442 = vpop.permute.xlu0 %2441
        %2443 = vrot.lane.b32.xlu0 %v2168, 64
        %v2444 = vpop.permute.xlu0 %2443
        %2445 = vrot.lane.b32.xlu0 %v2173, 64
        %v2446 = vpop.permute.xlu0 %2445
        %2447 = vrot.lane.b32.xlu0 %v2176, 64
        %v2448 = vpop.permute.xlu0 %2447
        %2449 = vrot.lane.b32.xlu0 %v2181, 64
        %v2450 = vpop.permute.xlu0 %2449
        %2451 = vrot.lane.b32.xlu0 %v2184, 64
        %v2452 = vpop.permute.xlu0 %2451
        %2453 = vrot.lane.b32.xlu0 %v2189, 64
        %v2454 = vpop.permute.xlu0 %2453
        %2455 = vrot.lane.b32.xlu0 %v2192, 64
        %v2456 = vpop.permute.xlu0 %2455
        %2457 = vrot.lane.b32.xlu0 %v2197, 64
        %v2458 = vpop.permute.xlu0 %2457
        %2459 = vrot.lane.b32.xlu0 %v2200, 64
        %v2460 = vpop.permute.xlu0 %2459
        %2461 = vrot.lane.b32.xlu0 %v2205, 64
        %v2462 = vpop.permute.xlu0 %2461
        %2463 = vrot.lane.b32.xlu0 %v2208, 64
        %v2464 = vpop.permute.xlu0 %2463
        %2465 = vrot.lane.b32.xlu0 %v2213, 64
        %v2466 = vpop.permute.xlu0 %2465
        %2467 = vrot.lane.b32.xlu0 %v2216, 64
        %v2468 = vpop.permute.xlu0 %2467
        %2469 = vrot.lane.b32.xlu0 %v2221, 64
        %v2470 = vpop.permute.xlu0 %2469
        %2471 = vrot.lane.b32.xlu0 %v2224, 64
        %v2472 = vpop.permute.xlu0 %2471
        %2473 = vrot.lane.b32.xlu0 %v2229, 64
        %v2474 = vpop.permute.xlu0 %2473
        %2475 = vrot.lane.b32.xlu0 %v2232, 64
        %v2476 = vpop.permute.xlu0 %2475
        %2477 = vrot.lane.b32.xlu0 %v2237, 64
        %v2478 = vpop.permute.xlu0 %2477
        %2479 = vrot.lane.b32.xlu0 %v2240, 64
        %v2480 = vpop.permute.xlu0 %2479
        %2481 = vrot.lane.b32.xlu0 %v2245, 64
        %v2482 = vpop.permute.xlu0 %2481
        %2483 = vrot.lane.b32.xlu0 %v2248, 64
        %v2484 = vpop.permute.xlu0 %2483
        %2485 = vrot.lane.b32.xlu0 %v2253, 64
        %v2486 = vpop.permute.xlu0 %2485
        %2487 = vrot.lane.b32.xlu0 %v2256, 64
        %v2488 = vpop.permute.xlu0 %2487
        %2489 = vrot.lane.b32.xlu0 %v2261, 64
        %v2490 = vpop.permute.xlu0 %2489
        %2491 = vrot.lane.b32.xlu0 %v2264, 64
        %v2492 = vpop.permute.xlu0 %2491
        %v2525 = vadd.f32 %v2395, %v2430
        %v2526 = vadd.f32 %v2396, %v2432
        %v2527 = vadd.f32 %v2397, %v2434
        %v2528 = vadd.f32 %v2398, %v2436
        %v2529 = vadd.f32 %v2399, %v2438
        %v2530 = vadd.f32 %v2400, %v2440
        %v2531 = vadd.f32 %v2401, %v2442
        %v2532 = vadd.f32 %v2402, %v2444
        %v2533 = vadd.f32 %v2403, %v2446
        %v2534 = vadd.f32 %v2404, %v2448
        %v2535 = vadd.f32 %v2405, %v2450
        %v2536 = vadd.f32 %v2406, %v2452
        %v2537 = vadd.f32 %v2407, %v2454
        %v2538 = vadd.f32 %v2408, %v2456
        %v2539 = vadd.f32 %v2409, %v2458
        %v2540 = vadd.f32 %v2410, %v2460
        %v2541 = vadd.f32 %v2411, %v2462
        %v2542 = vadd.f32 %v2412, %v2464
        %v2543 = vadd.f32 %v2413, %v2466
        %v2544 = vadd.f32 %v2414, %v2468
        %v2545 = vadd.f32 %v2415, %v2470
        %v2546 = vadd.f32 %v2416, %v2472
        %v2547 = vadd.f32 %v2417, %v2474
        %v2548 = vadd.f32 %v2418, %v2476
        %v2549 = vadd.f32 %v2419, %v2478
        %v2550 = vadd.f32 %v2420, %v2480
        %v2551 = vadd.f32 %v2421, %v2482
        %v2552 = vadd.f32 %v2422, %v2484
        %v2553 = vadd.f32 %v2423, %v2486
        %v2554 = vadd.f32 %v2424, %v2488
        %v2555 = vadd.f32 %v2425, %v2490
        %v2556 = vadd.f32 %v2426, %v2492
        %v2557 = vmax.f32 %v2525, 0.0
        %v2558 = vmax.f32 %v2526, 0.0
        %v2559 = vmax.f32 %v2527, 0.0
        %v2560 = vmax.f32 %v2528, 0.0
        %v2561 = vmax.f32 %v2529, 0.0
        %v2562 = vmax.f32 %v2530, 0.0
        %v2563 = vmax.f32 %v2531, 0.0
        %v2564 = vmax.f32 %v2532, 0.0
        %v2565 = vmax.f32 %v2533, 0.0
        %v2566 = vmax.f32 %v2534, 0.0
        %v2567 = vmax.f32 %v2535, 0.0
        %v2568 = vmax.f32 %v2536, 0.0
        %v2569 = vmax.f32 %v2537, 0.0
        %v2570 = vmax.f32 %v2538, 0.0
        %v2571 = vmax.f32 %v2539, 0.0
        %v2572 = vmax.f32 %v2540, 0.0
        %v2573 = vmax.f32 %v2541, 0.0
        %v2574 = vmax.f32 %v2542, 0.0
        %v2575 = vmax.f32 %v2543, 0.0
        %v2576 = vmax.f32 %v2544, 0.0
        %v2577 = vmax.f32 %v2545, 0.0
        %v2578 = vmax.f32 %v2546, 0.0
        %v2579 = vmax.f32 %v2547, 0.0
        %v2580 = vmax.f32 %v2548, 0.0
        %v2581 = vmax.f32 %v2549, 0.0
        %v2582 = vmax.f32 %v2550, 0.0
        %v2583 = vmax.f32 %v2551, 0.0
        %v2584 = vmax.f32 %v2552, 0.0
        %v2585 = vmax.f32 %v2553, 0.0
        %v2586 = vmax.f32 %v2554, 0.0
        %v2587 = vmax.f32 %v2555, 0.0
        %v2588 = vmax.f32 %v2556, 0.0
        %v2589 = vpack.c.bf16 %v2558, %v2557
        %v2590 = vpack.c.bf16 %v2560, %v2559
        %v2591 = vpack.c.bf16 %v2562, %v2561
        %v2592 = vpack.c.bf16 %v2564, %v2563
        %v2593 = vpack.c.bf16 %v2566, %v2565
        %v2594 = vpack.c.bf16 %v2568, %v2567
        %v2595 = vpack.c.bf16 %v2570, %v2569
        %v2596 = vpack.c.bf16 %v2572, %v2571
        %v2597 = vpack.c.bf16 %v2574, %v2573
        %v2598 = vpack.c.bf16 %v2576, %v2575
        %v2599 = vpack.c.bf16 %v2578, %v2577
        %v2600 = vpack.c.bf16 %v2580, %v2579
        %v2601 = vpack.c.bf16 %v2582, %v2581
        %v2602 = vpack.c.bf16 %v2584, %v2583
        %v2603 = vpack.c.bf16 %v2586, %v2585
        %v2604 = vpack.c.bf16 %v2588, %v2587
        %v2605 = vld [vmem:[%s4] sm:$0xf]
        %v2606 = vld [vmem:[%s4 + $0x4] sm:$0xf]
        %v2607 = vld [vmem:[%s4 + $0x8] sm:$0xf]
        %v2608 = vld [vmem:[%s4 + $0xc] sm:$0xf]
        %v2613 = vunpack.c.l.b16 %v2605
        %v2614 = vunpack.c.l.b16 %v2606
        %v2615 = vunpack.c.l.b16 %v2607
        %v2616 = vunpack.c.l.b16 %v2608
        %v2617 = vpack.c.b16 %v2614, %v2613
        %v2618 = vpack.c.b16 %v2616, %v2615
        %vm2621 = vcmask 261120
        %v2623 = vsel %vm2621, %v2589, 0
        %v2626 = vsel %vm2621, %v2590, 0
        %v2629 = vsel %vm2621, %v2591, 0
        %v2632 = vsel %vm2621, %v2592, 0
        %v2635 = vsel %vm2621, %v2593, 0
        %v2638 = vsel %vm2621, %v2594, 0
        %v2641 = vsel %vm2621, %v2595, 0
        %v2644 = vsel %vm2621, %v2596, 0
        %v2647 = vsel %vm2621, %v2597, 0
        %v2650 = vsel %vm2621, %v2598, 0
        %v2653 = vsel %vm2621, %v2599, 0
        %v2656 = vsel %vm2621, %v2600, 0
        %v2659 = vsel %vm2621, %v2601, 0
        %v2662 = vsel %vm2621, %v2602, 0
        %v2665 = vsel %vm2621, %v2603, 0
        %v2668 = vsel %vm2621, %v2604, 0
        %2670 = vmatprep.subr.bf16.mxu0 0
        %2671 = vmatpush1.bf16.msra.mxu0 0
        %2672 = vmatprep.subr.bf16.mxu0 0
        %2673 = vmatpush1.bf16.msra.mxu0 0
        %2674 = vmatprep.subr.bf16.mxu0 0
        %2675 = vmatpush1.bf16.msra.mxu0 0
        %2676 = vmatprep.subr.bf16.mxu0 0
        %2677 = vmatpush1.bf16.msra.mxu0 0
        %2678 = vmatprep.subr.bf16.mxu0 0
        %2679 = vmatpush1.bf16.msra.mxu0 0
        %2680 = vmatprep.subr.bf16.mxu0 0
        %2681 = vmatpush1.bf16.msra.mxu0 0
        %2682 = vmatprep.subr.bf16.mxu0 0
        %2683 = vmatpush1.bf16.msra.mxu0 %v2618
        %2684 = vmatprep.subr.bf16.mxu0 0
        %2685 = vmatpush1.bf16.msra.mxu0 %v2617
        %2686 = vmatprep.subr.bf16.mxu0 0
        %2687 = vmatpush2.bf16.msra.mxu0 0
        %2688 = vmatprep.subr.bf16.mxu0 0
        %2689 = vmatpush2.bf16.msra.mxu0 0
        %2690 = vmatprep.subr.bf16.mxu0 0
        %2691 = vmatpush2.bf16.msra.mxu0 0
        %2692 = vmatprep.subr.bf16.mxu0 0
        %2693 = vmatpush2.bf16.msra.mxu0 0
        %2694 = vmatprep.subr.bf16.mxu0 0
        %2695 = vmatpush2.bf16.msra.mxu0 0
        %2696 = vmatprep.subr.bf16.mxu0 0
        %2697 = vmatpush2.bf16.msra.mxu0 0
        %2698 = vmatprep.subr.bf16.mxu0 0
        %2699 = vmatpush2.bf16.msra.mxu0 0
        %2700 = vmatprep.subr.bf16.mxu0 0
        %2701 = vmatpush2.bf16.msra.mxu0 0
        %2702 = vmatprep.mubr.bf16.mxu0 0
        %2703 = vmatmul.mubr.bf16.gmra.mxu0 %v2623
        %v2704 = vpop.f32.mrf.mxu0
        %v2705 = vadd.f32 0.0, %v2704
        %v2706 = vpop.f32.mrf.mxu0
        %v2707 = vpop.f32.mrf.mxu0
        %v2708 = vadd.f32 0.0, %v2707
        %v2709 = vpop.f32.mrf.mxu0
        %2710 = vmatprep.mubr.bf16.mxu0 0
        %2711 = vmatmul.mubr.bf16.gmra.mxu0 %v2626
        %v2712 = vpop.f32.mrf.mxu0
        %v2713 = vadd.f32 0.0, %v2712
        %v2714 = vpop.f32.mrf.mxu0
        %v2715 = vpop.f32.mrf.mxu0
        %v2716 = vadd.f32 0.0, %v2715
        %v2717 = vpop.f32.mrf.mxu0
        %2718 = vmatprep.mubr.bf16.mxu0 0
        %2719 = vmatmul.mubr.bf16.gmra.mxu0 %v2629
        %v2720 = vpop.f32.mrf.mxu0
        %v2721 = vadd.f32 0.0, %v2720
        %v2722 = vpop.f32.mrf.mxu0
        %v2723 = vpop.f32.mrf.mxu0
        %v2724 = vadd.f32 0.0, %v2723
        %v2725 = vpop.f32.mrf.mxu0
        %2726 = vmatprep.mubr.bf16.mxu0 0
        %2727 = vmatmul.mubr.bf16.gmra.mxu0 %v2632
        %v2728 = vpop.f32.mrf.mxu0
        %v2729 = vadd.f32 0.0, %v2728
        %v2730 = vpop.f32.mrf.mxu0
        %v2731 = vpop.f32.mrf.mxu0
        %v2732 = vadd.f32 0.0, %v2731
        %v2733 = vpop.f32.mrf.mxu0
        %2734 = vmatprep.mubr.bf16.mxu0 0
        %2735 = vmatmul.mubr.bf16.gmra.mxu0 %v2635
        %v2736 = vpop.f32.mrf.mxu0
        %v2737 = vadd.f32 0.0, %v2736
        %v2738 = vpop.f32.mrf.mxu0
        %v2739 = vpop.f32.mrf.mxu0
        %v2740 = vadd.f32 0.0, %v2739
        %v2741 = vpop.f32.mrf.mxu0
        %2742 = vmatprep.mubr.bf16.mxu0 0
        %2743 = vmatmul.mubr.bf16.gmra.mxu0 %v2638
        %v2744 = vpop.f32.mrf.mxu0
        %v2745 = vadd.f32 0.0, %v2744
        %v2746 = vpop.f32.mrf.mxu0
        %v2747 = vpop.f32.mrf.mxu0
        %v2748 = vadd.f32 0.0, %v2747
        %v2749 = vpop.f32.mrf.mxu0
        %2750 = vmatprep.mubr.bf16.mxu0 0
        %2751 = vmatmul.mubr.bf16.gmra.mxu0 %v2641
        %v2752 = vpop.f32.mrf.mxu0
        %v2753 = vadd.f32 0.0, %v2752
        %v2754 = vpop.f32.mrf.mxu0
        %v2755 = vpop.f32.mrf.mxu0
        %v2756 = vadd.f32 0.0, %v2755
        %v2757 = vpop.f32.mrf.mxu0
        %2758 = vmatprep.mubr.bf16.mxu0 0
        %2759 = vmatmul.mubr.bf16.gmra.mxu0 %v2644
        %v2760 = vpop.f32.mrf.mxu0
        %v2761 = vadd.f32 0.0, %v2760
        %v2762 = vpop.f32.mrf.mxu0
        %v2763 = vpop.f32.mrf.mxu0
        %v2764 = vadd.f32 0.0, %v2763
        %v2765 = vpop.f32.mrf.mxu0
        %2766 = vmatprep.mubr.bf16.mxu0 0
        %2767 = vmatmul.mubr.bf16.gmra.mxu0 %v2647
        %v2768 = vpop.f32.mrf.mxu0
        %v2769 = vadd.f32 0.0, %v2768
        %v2770 = vpop.f32.mrf.mxu0
        %v2771 = vpop.f32.mrf.mxu0
        %v2772 = vadd.f32 0.0, %v2771
        %v2773 = vpop.f32.mrf.mxu0
        %2774 = vmatprep.mubr.bf16.mxu0 0
        %2775 = vmatmul.mubr.bf16.gmra.mxu0 %v2650
        %v2776 = vpop.f32.mrf.mxu0
        %v2777 = vadd.f32 0.0, %v2776
        %v2778 = vpop.f32.mrf.mxu0
        %v2779 = vpop.f32.mrf.mxu0
        %v2780 = vadd.f32 0.0, %v2779
        %v2781 = vpop.f32.mrf.mxu0
        %2782 = vmatprep.mubr.bf16.mxu0 0
        %2783 = vmatmul.mubr.bf16.gmra.mxu0 %v2653
        %v2784 = vpop.f32.mrf.mxu0
        %v2785 = vadd.f32 0.0, %v2784
        %v2786 = vpop.f32.mrf.mxu0
        %v2787 = vpop.f32.mrf.mxu0
        %v2788 = vadd.f32 0.0, %v2787
        %v2789 = vpop.f32.mrf.mxu0
        %2790 = vmatprep.mubr.bf16.mxu0 0
        %2791 = vmatmul.mubr.bf16.gmra.mxu0 %v2656
        %v2792 = vpop.f32.mrf.mxu0
        %v2793 = vadd.f32 0.0, %v2792
        %v2794 = vpop.f32.mrf.mxu0
        %v2795 = vpop.f32.mrf.mxu0
        %v2796 = vadd.f32 0.0, %v2795
        %v2797 = vpop.f32.mrf.mxu0
        %2798 = vmatprep.mubr.bf16.mxu0 0
        %2799 = vmatmul.mubr.bf16.gmra.mxu0 %v2659
        %v2800 = vpop.f32.mrf.mxu0
        %v2801 = vadd.f32 0.0, %v2800
        %v2802 = vpop.f32.mrf.mxu0
        %v2803 = vpop.f32.mrf.mxu0
        %v2804 = vadd.f32 0.0, %v2803
        %v2805 = vpop.f32.mrf.mxu0
        %2806 = vmatprep.mubr.bf16.mxu0 0
        %2807 = vmatmul.mubr.bf16.gmra.mxu0 %v2662
        %v2808 = vpop.f32.mrf.mxu0
        %v2809 = vadd.f32 0.0, %v2808
        %v2810 = vpop.f32.mrf.mxu0
        %v2811 = vpop.f32.mrf.mxu0
        %v2812 = vadd.f32 0.0, %v2811
        %v2813 = vpop.f32.mrf.mxu0
        %2814 = vmatprep.mubr.bf16.mxu0 0
        %2815 = vmatmul.mubr.bf16.gmra.mxu0 %v2665
        %v2816 = vpop.f32.mrf.mxu0
        %v2817 = vadd.f32 0.0, %v2816
        %v2818 = vpop.f32.mrf.mxu0
        %v2819 = vpop.f32.mrf.mxu0
        %v2820 = vadd.f32 0.0, %v2819
        %v2821 = vpop.f32.mrf.mxu0
        %2822 = vmatprep.mubr.bf16.mxu0 0
        %2823 = vmatmul.mubr.bf16.gmra.mxu0 %v2668
        %v2824 = vpop.f32.mrf.mxu0
        %v2825 = vadd.f32 0.0, %v2824
        %v2826 = vpop.f32.mrf.mxu0
        %v2827 = vpop.f32.mrf.mxu0
        %v2828 = vadd.f32 0.0, %v2827
        %v2829 = vpop.f32.mrf.mxu0
        %2830 = vdwg.mxu0
        %v2831 = vadd.f32 %v2705, %v382
        %v2832 = vadd.f32 %v2708, %v383
        %v2833 = vadd.f32 %v2713, %v384
        %v2834 = vadd.f32 %v2716, %v385
        %v2835 = vadd.f32 %v2721, %v386
        %v2836 = vadd.f32 %v2724, %v387
        %v2837 = vadd.f32 %v2729, %v388
        %v2838 = vadd.f32 %v2732, %v389
        %v2839 = vadd.f32 %v2737, %v390
        %v2840 = vadd.f32 %v2740, %v391
        %v2841 = vadd.f32 %v2745, %v392
        %v2842 = vadd.f32 %v2748, %v393
        %v2843 = vadd.f32 %v2753, %v394
        %v2844 = vadd.f32 %v2756, %v395
        %v2845 = vadd.f32 %v2761, %v396
        %v2846 = vadd.f32 %v2764, %v397
        %v2847 = vadd.f32 %v2769, %v398
        %v2848 = vadd.f32 %v2772, %v399
        %v2849 = vadd.f32 %v2777, %v400
        %v2850 = vadd.f32 %v2780, %v401
        %v2851 = vadd.f32 %v2785, %v402
        %v2852 = vadd.f32 %v2788, %v403
        %v2853 = vadd.f32 %v2793, %v404
        %v2854 = vadd.f32 %v2796, %v405
        %v2855 = vadd.f32 %v2801, %v406
        %v2856 = vadd.f32 %v2804, %v407
        %v2857 = vadd.f32 %v2809, %v408
        %v2858 = vadd.f32 %v2812, %v409
        %v2859 = vadd.f32 %v2817, %v410
        %v2860 = vadd.f32 %v2820, %v411
        %v2861 = vadd.f32 %v2825, %v412
        %v2862 = vadd.f32 %v2828, %v413
        %2863 = vst [vmem:[%s370] sm:$0xff] %v2831
        %2864 = vst [vmem:[%s370 + $0x8] sm:$0xff] %v2832
        %2865 = vst [vmem:[%s370 + $0x10] sm:$0xff] %v2833
        %2866 = vst [vmem:[%s370 + $0x18] sm:$0xff] %v2834
        %2867 = vst [vmem:[%s370 + $0x20] sm:$0xff] %v2835
        %2868 = vst [vmem:[%s370 + $0x28] sm:$0xff] %v2836
        %2869 = vst [vmem:[%s370 + $0x30] sm:$0xff] %v2837
        %2870 = vst [vmem:[%s370 + $0x38] sm:$0xff] %v2838
        %2871 = vst [vmem:[%s370 + $0x40] sm:$0xff] %v2839
        %2872 = vst [vmem:[%s370 + $0x48] sm:$0xff] %v2840
        %2873 = vst [vmem:[%s370 + $0x50] sm:$0xff] %v2841
        %2874 = vst [vmem:[%s370 + $0x58] sm:$0xff] %v2842
        %2875 = vst [vmem:[%s370 + $0x60] sm:$0xff] %v2843
        %2876 = vst [vmem:[%s370 + $0x68] sm:$0xff] %v2844
        %2877 = vst [vmem:[%s370 + $0x70] sm:$0xff] %v2845
        %2878 = vst [vmem:[%s370 + $0x78] sm:$0xff] %v2846
        %2879 = vst [vmem:[%s370 + $0x80] sm:$0xff] %v2847
        %2880 = vst [vmem:[%s370 + $0x88] sm:$0xff] %v2848
        %2881 = vst [vmem:[%s370 + $0x90] sm:$0xff] %v2849
        %2882 = vst [vmem:[%s370 + $0x98] sm:$0xff] %v2850
        %2883 = vst [vmem:[%s370 + $0xa0] sm:$0xff] %v2851
        %2884 = vst [vmem:[%s370 + $0xa8] sm:$0xff] %v2852
        %2885 = vst [vmem:[%s370 + $0xb0] sm:$0xff] %v2853
        %2886 = vst [vmem:[%s370 + $0xb8] sm:$0xff] %v2854
        %2887 = vst [vmem:[%s370 + $0xc0] sm:$0xff] %v2855
        %2888 = vst [vmem:[%s370 + $0xc8] sm:$0xff] %v2856
        %2889 = vst [vmem:[%s370 + $0xd0] sm:$0xff] %v2857
        %2890 = vst [vmem:[%s370 + $0xd8] sm:$0xff] %v2858
        %2891 = vst [vmem:[%s370 + $0xe0] sm:$0xff] %v2859
        %2892 = vst [vmem:[%s370 + $0xe8] sm:$0xff] %v2860
        %2893 = vst [vmem:[%s370 + $0xf0] sm:$0xff] %v2861
        %2894 = vst [vmem:[%s370 + $0xf8] sm:$0xff] %v2862
        %s2895 = sand.u32 %s189, 1
        %s2896 = scalar_lea.sflag [#allocation5], %s2895
        %s2897 = sand.u32 %s189, 1
        %s2898 = smul.addr %s2897, 256
        %s2899 = scalar_lea.vmem [#allocation9], %s2898
        // Predicated region
        $region69: #{tpu_custom_call.1} parent=39 // pred_check
          %p2900 = pneg %p199
        $region70: #{tpu_custom_call.1} parent=39 // pred_check_branch
          %2902 = sbr.rel (%p2900) target = $region72
        $region71: #{tpu_custom_call.1} parent=39 // pred_region
          %s2903 = smul.u32 16, %s30
          %s2905 = ssub.s32 4096, 4096
          %2906 = vsyncadd %s2896, %s2905
          %s2907 = smul.addr %s2903, 2
          %s2908 = smul.addr %s29, 32
          %s2909 = sadd.s32 %s2907, %s2908
          %s2910 = smul.addr %s2909, 128
          %s2911 = scalar_lea.hbm %s5, %s2910
          %s2912 = sshll.u32 %s2899, 4
          %s2913 = int_to_ptr.vmem [resolvable:$true] %s2912
          %2918 = dma.vmem_to_hbm [thread:$0]  %s2913, 4096, %s2911, %s2896, 128, 128, 8
        $region72: #{tpu_custom_call.1} parent=39 // pred_fallthru
          _
      $region40: #{tpu_custom_call.1} parent=5 // pred_fallthru
        _
      %p2919 = scmp.le.s32.totalorder 2, %s20
      // Predicated region
      $region73: #{tpu_custom_call.1} parent=5 // pred_check
        %p2920 = pneg %p2919
      $region74: #{tpu_custom_call.1} parent=5 // pred_check_branch
        %2922 = sbr.rel (%p2920) target = $region76
      $region75: #{tpu_custom_call.1} parent=5 // pred_region
        %s2923 = ssub.s32 %s20, 2
        // Predicated region
        $region77: #{tpu_custom_call.1} parent=75 // pred_check
          %p2924 = pneg %p205
        $region78: #{tpu_custom_call.1} parent=75 // pred_check_branch
          %2926 = sbr.rel (%p2924) target = $region80
        $region79: #{tpu_custom_call.1} parent=75 // pred_region
          %s2927 = sand.u32 %s190, 1
          %s2928 = scalar_lea.sflag [#allocation5], %s2927
          %s2929 = sand.u32 %s190, 1
          %s2930 = smul.addr %s2929, 256
          %s2931 = scalar_lea.vmem [#allocation9], %s2930
          %2932 = dma.done %s2928, 4096
        $region80: #{tpu_custom_call.1} parent=75 // pred_fallthru
          _
      $region76: #{tpu_custom_call.1} parent=5 // pred_fallthru
        _
    $region6: #{tpu_custom_call.1} parent=1 // loop_footer
      %s24 = sadd.s32 1, %s20
    $region7: #{tpu_custom_call.1} parent=1 // loop_footer_branch
      %19 = sbr.rel target = $region3
    $region8: #{tpu_custom_call.1} parent=1 // loop_exit
      _
    %2933 = vsyncpa [#allocation4], 1
    %s2934 = scalar_lea.sflag [#allocation4], 1
    %2935 = vsyncpa %s2934, 1
    %2936 = vsyncpa [#allocation7], 1
    %s2937 = scalar_lea.sflag [#allocation7], 1
    %2938 = vsyncpa %s2937, 1
    %2939 = vsyncpa [#allocation5], 1
    %s2940 = scalar_lea.sflag [#allocation5], 1
    %2941 = vsyncpa %s2940, 1

</llo_original>
